<compile_context>
chip_gen: v7x
topology: tpu7x:2x2x1
jax: 0.10.0
libtpu: 0.0.40
codegen_flags: <defaults>
</compile_context>

<pallas_src>
import jax
import jax.numpy as jnp
from jax.experimental import pallas as pl
from jax.experimental.pallas import tpu as pltpu

# ----------------------------------------------------------------------------
# Static layout constants (layers = "256,128")
# ----------------------------------------------------------------------------
L1 = 256          # first MLP layer width
L2 = 128          # second MLP layer width (= hidden dim of each modality)
DPAD = 128        # every raw feature dim is zero-padded up to this

# Row offsets inside the packed (PACK_ROWS, 256) bf16 WEIGHT buffer.
R_W1A = 0                    # audio  Linear1 weight, padded to (128, 256)
R_W1T = R_W1A + DPAD         # text   Linear1 weight
R_W1V = R_W1T + DPAD         # video  Linear1 weight
R_MW1A = R_W1V + DPAD        # attention-MLP Linear1 weight, audio-block (128, 256)
R_MW1T = R_MW1A + L2         #   ... text-block
R_MW1V = R_MW1T + L2         #   ... video-block
R_W2P1 = R_MW1V + L2         # [audio Linear2 | text Linear2]   -> (256, 256)
R_W2P2 = R_W2P1 + L1         # [video Linear2 | attn  Linear2]  -> (256, 256)
R_HEAD = R_W2P2 + L1         # [fc_att (pad 128) | fc_out_1|fc_out_2 (pad 128)] -> (128, 256)
PACK_ROWS = R_HEAD + L2      # 1408 (multiple of 16 -> dense bf16 sublane packing)

BIAS_ROWS = 8                # tiny resident f32 bias buffer (8, 256)


# ----------------------------------------------------------------------------
# Kernel: whole forward pass for one batch tile
# ----------------------------------------------------------------------------
def attention_kernel(x_ref, p_ref, b_ref, fused_ref, head_ref):
    f32, bf16 = jnp.float32, jnp.bfloat16

    def mm(x, w):
        # bf16 operands, f32 accumulation on the MXU.
        return jnp.dot(x.astype(bf16), w, preferred_element_type=f32)

    def relu(v):
        return jnp.maximum(v, 0.0)

    x = x_ref[...]                                   # (TB, 3*DPAD) bf16
    xa = x[:, 0:DPAD]
    xt = x[:, DPAD:2 * DPAD]
    xv = x[:, 2 * DPAD:3 * DPAD]

    # biases (full-precision f32 side buffer)
    ab1 = b_ref[0:1, :]
    tb1 = b_ref[1:2, :]
    vb1 = b_ref[2:3, :]
    mb1 = b_ref[3:4, :]
    ab2 = b_ref[4:5, 0:L2]
    tb2 = b_ref[4:5, L2:2 * L2]
    vb2 = b_ref[5:6, 0:L2]
    mb2 = b_ref[5:6, L2:2 * L2]
    attb = b_ref[6:7, 0:L2]
    ob = b_ref[6:7, L2:2 * L2]

    # --- modality MLPs: Linear -> ReLU -> Dropout(id) -> Linear -> ReLU -> Dropout(id)
    ha1 = relu(mm(xa, p_ref[R_W1A:R_W1A + DPAD, :]) + ab1)           # (TB, 256)
    ht1 = relu(mm(xt, p_ref[R_W1T:R_W1T + DPAD, :]) + tb1)
    hv1 = relu(mm(xv, p_ref[R_W1V:R_W1V + DPAD, :]) + vb1)

    ah = relu(mm(ha1, p_ref[R_W2P1:R_W2P1 + L1, 0:L2]) + ab2)        # (TB, 128)
    th = relu(mm(ht1, p_ref[R_W2P1:R_W2P1 + L1, L2:2 * L2]) + tb2)
    vh = relu(mm(hv1, p_ref[R_W2P2:R_W2P2 + L1, 0:L2]) + vb2)

    # --- attention MLP over concat([ah, th, vh]) WITHOUT materializing the concat:
    #     split mw1 into three 128x256 blocks and accumulate on the MXU.
    hm1 = relu(mm(ah, p_ref[R_MW1A:R_MW1A + L2, :])
               + mm(th, p_ref[R_MW1T:R_MW1T + L2, :])
               + mm(vh, p_ref[R_MW1V:R_MW1V + L2, :]) + mb1)         # (TB, 256)
    hm2 = relu(mm(hm1, p_ref[R_W2P2:R_W2P2 + L1, L2:2 * L2]) + mb2)  # (TB, 128)

    # fc_att padded from 3 -> 128 output lanes; only columns 0..2 are real.
    att = mm(hm2, p_ref[R_HEAD:R_HEAD + L2, 0:L2]) + attb            # (TB, 128)

    # fused = matmul(stack([ah, th, vh], dim=2), att[:, :3, None]).squeeze(-1)
    fused = (ah * att[:, 0:1] + th * att[:, 1:2] + vh * att[:, 2:3])  # (TB, 128) f32
    fused_ref[...] = fused

    # fc_out_1 and fc_out_2 fused into one lane-dense (TB, 128) matmul + store.
    head_ref[...] = mm(fused, p_ref[R_HEAD:R_HEAD + L2, L2:2 * L2]) + ob


# ----------------------------------------------------------------------------
# Host-side parameter packing (done once; buffers are reusable across calls)
# ----------------------------------------------------------------------------
def pack_params(params):
    """Pack the 11 (in,out)-layout f32 weights into one (PACK_ROWS, 256) bf16 buffer."""
    (aw1, _, aw2, _,
     tw1, _, tw2, _,
     vw1, _, vw2, _,
     mw1, _, mw2, _,
     att_w, _, o1_w, _, o2_w, _) = params

    def pad_rows(w, rows):
        return jnp.pad(w, ((0, rows - w.shape[0]), (0, 0)))

    def pad_cols(w, cols):
        return jnp.pad(w, ((0, 0), (0, cols - w.shape[1])))

    blocks = [
        pad_rows(aw1, DPAD), pad_rows(tw1, DPAD), pad_rows(vw1, DPAD),   # 3 x (128, 256)
        mw1[0:L2, :], mw1[L2:2 * L2, :], mw1[2 * L2:3 * L2, :],          # 3 x (128, 256)
        jnp.concatenate([aw2, tw2], axis=1),                             # (256, 256)
        jnp.concatenate([vw2, mw2], axis=1),                             # (256, 256)
        jnp.concatenate([pad_cols(att_w, L2),
                         pad_cols(jnp.concatenate([o1_w, o2_w], axis=1), L2)], axis=1),  # (128, 256)
    ]
    packed = jnp.concatenate(blocks, axis=0)
    assert packed.shape == (PACK_ROWS, L1)
    return packed.astype(jnp.bfloat16)


def pack_biases(params):
    """Pack the 11 bias rows into a tiny (8, 256) f32 buffer (full precision)."""
    (_, ab1, _, ab2,
     _, tb1, _, tb2,
     _, vb1, _, vb2,
     _, mb1, _, mb2,
     _, att_b, _, o1_b, _, o2_b) = params

    def pad_cols(w, cols):
        return jnp.pad(w, ((0, 0), (0, cols - w.shape[1])))

    rows = [
        ab1, tb1, vb1, mb1,                                              # 4 x (1, 256)
        jnp.concatenate([ab2, tb2], axis=1),                             # (1, 256)
        jnp.concatenate([vb2, mb2], axis=1),                             # (1, 256)
        jnp.concatenate([pad_cols(att_b, L2),
                         pad_cols(jnp.concatenate([o1_b, o2_b], axis=1), L2)], axis=1),
        jnp.zeros((1, L1), jnp.float32),
    ]
    b = jnp.concatenate(rows, axis=0)
    assert b.shape == (BIAS_ROWS, L1)
    return b.astype(jnp.float32)


# ----------------------------------------------------------------------------
# Batch tiling heuristic
# ----------------------------------------------------------------------------
def _round_up(v, m):
    return ((v + m - 1) // m) * m


def _pick_batch_tile(B):
    """TB multiple of 16 (bf16 sublanes); Bp multiple of TB (no partial edge
    block); >=2 grid steps once the batch is big enough (both v7x cores);
    capped at 256 rows (fills the v6e/v7x 256-wide MXU)."""
    b16 = _round_up(max(B, 1), 16)
    if b16 <= 32:
        tb = b16                                # too small to split
    elif b16 <= 512:
        tb = _round_up((b16 + 1) // 2, 16)      # exactly 2 grid steps
    else:
        tb = 256
    bp = _round_up(b16, tb)
    return tb, bp


# ----------------------------------------------------------------------------
# Wrapper
# ----------------------------------------------------------------------------
def attention_forward(audio_feat, text_feat, video_feat, packed_w, packed_b,
                      out_dim1, out_dim2):
    B = audio_feat.shape[0]
    TB, Bp = _pick_batch_tile(B)

    def prep(x):
        x = x.astype(jnp.bfloat16)              # kernel rounds to bf16 anyway
        return jnp.pad(x, ((0, Bp - B), (0, DPAD - x.shape[1])))

    # single lane-aligned bf16 activation buffer: [audio | text | video]
    x = jnp.concatenate([prep(audio_feat), prep(text_feat), prep(video_feat)],
                        axis=1)                                  # (Bp, 384) bf16

    grid = (Bp // TB,)

    # NOTE: the resident params could take pipeline_mode=pl.Buffered(1) to
    # drop the redundant second copy; total VMEM (<6 MB) is far below limits,
    # so we keep the default for maximum portability.
    fused_p, head_p = pl.pallas_call(
        attention_kernel,
        out_shape=(jax.ShapeDtypeStruct((Bp, L2), jnp.float32),   # fused_feat
                   jax.ShapeDtypeStruct((Bp, L2), jnp.float32)),  # [emos | vals] padded
        grid=grid,
        in_specs=[
            pl.BlockSpec((TB, 3 * DPAD), lambda i: (i, 0)),       # activations (tiled)
            pl.BlockSpec((PACK_ROWS, L1), lambda i: (0, 0)),      # packed bf16 weights (resident)
            pl.BlockSpec((BIAS_ROWS, L1), lambda i: (0, 0)),      # f32 biases (resident)
        ],
        out_specs=(
            pl.BlockSpec((TB, L2), lambda i: (i, 0)),
            pl.BlockSpec((TB, L2), lambda i: (i, 0)),
        ),
        compiler_params=pltpu.CompilerParams(
            dimension_semantics=("parallel",)),
    )(x, packed_w, packed_b)

    fused = fused_p[:B]
    emos = head_p[:B, :out_dim1]
    vals = head_p[:B, out_dim1:out_dim1 + out_dim2]
    return fused, emos, vals


# ----------------------------------------------------------------------------
# Deterministic parameter construction (matches the PyTorch module shapes)
# ----------------------------------------------------------------------------
def make_params(key, audio_dim, text_dim, video_dim, output_dim1, output_dim2,
                layers=(256, 128)):
    l1, l2 = layers
    hiddendim = l2 * 3

    def linear_params(key, fan_in, fan_out):
        kw, kb = jax.random.split(key)
        scale = 1.0 / jnp.sqrt(jnp.float32(fan_in))
        w = jax.random.uniform(kw, (fan_in, fan_out), jnp.float32, -scale, scale)
        b = jax.random.uniform(kb, (1, fan_out), jnp.float32, -scale, scale)
        return w, b

    keys = jax.random.split(key, 11)
    params = []
    for i, in_dim in enumerate((audio_dim, text_dim, video_dim)):
        w1, b1 = linear_params(keys[2 * i], in_dim, l1)
        w2, b2 = linear_params(keys[2 * i + 1], l1, l2)
        params += [w1, b1, w2, b2]
    w1, b1 = linear_params(keys[6], hiddendim, l1)
    w2, b2 = linear_params(keys[7], l1, l2)
    params += [w1, b1, w2, b2]
    params += list(linear_params(keys[8], l2, 3))              # fc_att
    params += list(linear_params(keys[9], l2, output_dim1))    # fc_out_1
    params += list(linear_params(keys[10], l2, output_dim2))   # fc_out_2
    return params


# ----------------------------------------------------------------------------
# Pure-JAX reference (PyTorch semantics) for verification
# ----------------------------------------------------------------------------
def reference_forward(audio, text, video, params):
    (aw1, ab1, aw2, ab2,
     tw1, tb1, tw2, tb2,
     vw1, vb1, vw2, vb2,
     mw1, mb1, mw2, mb2,
     att_w, att_b, o1_w, o1_b, o2_w, o2_b) = params

    def mlp(x, w1, b1, w2, b2):
        h = jnp.maximum(x @ w1 + b1, 0.0)
        return jnp.maximum(h @ w2 + b2, 0.0)

    ah = mlp(audio, aw1, ab1, aw2, ab2)
    th = mlp(text, tw1, tb1, tw2, tb2)
    vh = mlp(video, vw1, vb1, vw2, vb2)
    mh1 = jnp.concatenate([ah, th, vh], axis=1)
    att = mlp(mh1, mw1, mb1, mw2, mb2) @ att_w + att_b          # (B, 3)
    mh2 = jnp.stack([ah, th, vh], axis=2)                       # (B, H, 3)
    fused = jnp.squeeze(jnp.matmul(mh2, att[:, :, None]), -1)   # (B, H)
    return fused, fused @ o1_w + o1_b, fused @ o2_w + o2_b


if __name__ == "__main__":
    batch = 8
    audio_dim, text_dim, video_dim = 32, 48, 64
    output_dim1, output_dim2 = 4, 1
    layers = (256, 128)

    key = jax.random.PRNGKey(0)
    k_a, k_t, k_v, k_p = jax.random.split(key, 4)
    audio = jax.random.normal(k_a, (batch, audio_dim), jnp.float32)
    text = jax.random.normal(k_t, (batch, text_dim), jnp.float32)
    video = jax.random.normal(k_v, (batch, video_dim), jnp.float32)

    params = make_params(k_p, audio_dim, text_dim, video_dim,
                         output_dim1, output_dim2, layers)
    packed_w = pack_params(params)
    packed_b = pack_biases(params)

    fused, emos, vals = jax.block_until_ready(
        attention_forward(audio, text, video, packed_w, packed_b,
                          output_dim1, output_dim2))

    # Reference: same bf16-quantized weights, f32 biases, f32 math (the kernel
    # additionally rounds activations to bf16 at each MXU input, hence the
    # loose tolerance).
    params_q = list(params)
    for i in range(0, len(params_q), 2):   # weights only; biases stay f32
        params_q[i] = params_q[i].astype(jnp.bfloat16).astype(jnp.float32)
    fused_r, emos_r, vals_r = reference_forward(audio, text, video, params_q)

    assert fused.shape == (batch, layers[-1])
    assert emos.shape == (batch, output_dim1)
    assert vals.shape == (batch, output_dim2)
    assert jnp.allclose(fused, fused_r, atol=3e-2, rtol=3e-2)
    assert jnp.allclose(emos, emos_r, atol=3e-2, rtol=3e-2)
    assert jnp.allclose(vals, vals_r, atol=3e-2, rtol=3e-2)

    print("KERNEL_OK")
</pallas_src>

<mosaic_0001>
module attributes {stable_mosaic.version = 11 : i64} {
  func.func @attention_kernel(%arg0: i32, %arg1: memref<16x384xbf16, #tpu.memory_space<vmem>>, %arg2: memref<1408x256xbf16, #tpu.memory_space<vmem>>, %arg3: memref<8x256xf32, #tpu.memory_space<vmem>>, %arg4: memref<16x128xf32, #tpu.memory_space<vmem>>, %arg5: memref<16x128xf32, #tpu.memory_space<vmem>>) attributes {dimension_semantics = [#tpu.dimension_semantics<parallel>], iteration_bounds = array<i64: 1>, scalar_prefetch = 0 : i64, scratch_operands = 0 : i64, tpu.core_type = #tpu.core_type<tc>, window_params = [{transform_indices = @transform_0, window_bounds = array<i64: 16, 384>}, {pipeline_mode = #tpu.pipeline_mode<synchronous>, transform_indices = @transform_1, window_bounds = array<i64: 1408, 256>}, {pipeline_mode = #tpu.pipeline_mode<synchronous>, transform_indices = @transform_2, window_bounds = array<i64: 8, 256>}, {transform_indices = @transform_3, window_bounds = array<i64: 16, 128>}, {transform_indices = @transform_4, window_bounds = array<i64: 16, 128>}]} {
    %c0 = arith.constant 0 : index
    %c0_0 = arith.constant 0 : index
    %0 = vector.load %arg1[%c0, %c0_0] : memref<16x384xbf16, #tpu.memory_space<vmem>>, vector<16x384xbf16>
    %1 = vector.extract_strided_slice %0 {offsets = [0, 0], sizes = [16, 128], strides = [1, 1]} : vector<16x384xbf16> to vector<16x128xbf16>
    %2 = vector.extract_strided_slice %0 {offsets = [0, 128], sizes = [16, 128], strides = [1, 1]} : vector<16x384xbf16> to vector<16x128xbf16>
    %3 = vector.extract_strided_slice %0 {offsets = [0, 256], sizes = [16, 128], strides = [1, 1]} : vector<16x384xbf16> to vector<16x128xbf16>
    %c0_1 = arith.constant 0 : index
    %c0_2 = arith.constant 0 : index
    %4 = vector.load %arg3[%c0_1, %c0_2] : memref<8x256xf32, #tpu.memory_space<vmem>>, vector<1x256xf32>
    %c1 = arith.constant 1 : index
    %c0_3 = arith.constant 0 : index
    %5 = vector.load %arg3[%c1, %c0_3] : memref<8x256xf32, #tpu.memory_space<vmem>>, vector<1x256xf32>
    %c2 = arith.constant 2 : index
    %c0_4 = arith.constant 0 : index
    %6 = vector.load %arg3[%c2, %c0_4] : memref<8x256xf32, #tpu.memory_space<vmem>>, vector<1x256xf32>
    %c3 = arith.constant 3 : index
    %c0_5 = arith.constant 0 : index
    %7 = vector.load %arg3[%c3, %c0_5] : memref<8x256xf32, #tpu.memory_space<vmem>>, vector<1x256xf32>
    %c4 = arith.constant 4 : index
    %c0_6 = arith.constant 0 : index
    %8 = vector.load %arg3[%c4, %c0_6] : memref<8x256xf32, #tpu.memory_space<vmem>>, vector<1x128xf32>
    %c4_7 = arith.constant 4 : index
    %c128 = arith.constant 128 : index
    %9 = vector.load %arg3[%c4_7, %c128] : memref<8x256xf32, #tpu.memory_space<vmem>>, vector<1x128xf32>
    %c5 = arith.constant 5 : index
    %c0_8 = arith.constant 0 : index
    %10 = vector.load %arg3[%c5, %c0_8] : memref<8x256xf32, #tpu.memory_space<vmem>>, vector<1x128xf32>
    %c5_9 = arith.constant 5 : index
    %c128_10 = arith.constant 128 : index
    %11 = vector.load %arg3[%c5_9, %c128_10] : memref<8x256xf32, #tpu.memory_space<vmem>>, vector<1x128xf32>
    %c6 = arith.constant 6 : index
    %c0_11 = arith.constant 0 : index
    %12 = vector.load %arg3[%c6, %c0_11] : memref<8x256xf32, #tpu.memory_space<vmem>>, vector<1x128xf32>
    %c6_12 = arith.constant 6 : index
    %c128_13 = arith.constant 128 : index
    %13 = vector.load %arg3[%c6_12, %c128_13] : memref<8x256xf32, #tpu.memory_space<vmem>>, vector<1x128xf32>
    %c0_14 = arith.constant 0 : index
    %c0_15 = arith.constant 0 : index
    %14 = vector.load %arg2[%c0_14, %c0_15] : memref<1408x256xbf16, #tpu.memory_space<vmem>>, vector<128x256xbf16>
    %cst = arith.constant dense<0.000000e+00> : vector<16x256xf32>
    %15 = tpu.matmul %1, %14, %cst {dimension_numbers = #tpu.dot_dimension_numbers<[1], [0], [0], [1], [0, 0, 1, 1], [], []>} : vector<16x128xbf16>, vector<128x256xbf16>, vector<16x256xf32> -> vector<16x256xf32>
    %16 = vector.broadcast %4 : vector<1x256xf32> to vector<16x256xf32>
    %17 = arith.addf %15, %16 : vector<16x256xf32>
    %cst_16 = arith.constant 0.000000e+00 : f32
    %18 = vector.broadcast %cst_16 : f32 to vector<16x256xf32>
    %19 = arith.maximumf %17, %18 : vector<16x256xf32>
    %c128_17 = arith.constant 128 : index
    %c0_18 = arith.constant 0 : index
    %20 = vector.load %arg2[%c128_17, %c0_18] : memref<1408x256xbf16, #tpu.memory_space<vmem>>, vector<128x256xbf16>
    %cst_19 = arith.constant dense<0.000000e+00> : vector<16x256xf32>
    %21 = tpu.matmul %2, %20, %cst_19 {dimension_numbers = #tpu.dot_dimension_numbers<[1], [0], [0], [1], [0, 0, 1, 1], [], []>} : vector<16x128xbf16>, vector<128x256xbf16>, vector<16x256xf32> -> vector<16x256xf32>
    %22 = vector.broadcast %5 : vector<1x256xf32> to vector<16x256xf32>
    %23 = arith.addf %21, %22 : vector<16x256xf32>
    %cst_20 = arith.constant 0.000000e+00 : f32
    %24 = vector.broadcast %cst_20 : f32 to vector<16x256xf32>
    %25 = arith.maximumf %23, %24 : vector<16x256xf32>
    %c256 = arith.constant 256 : index
    %c0_21 = arith.constant 0 : index
    %26 = vector.load %arg2[%c256, %c0_21] : memref<1408x256xbf16, #tpu.memory_space<vmem>>, vector<128x256xbf16>
    %cst_22 = arith.constant dense<0.000000e+00> : vector<16x256xf32>
    %27 = tpu.matmul %3, %26, %cst_22 {dimension_numbers = #tpu.dot_dimension_numbers<[1], [0], [0], [1], [0, 0, 1, 1], [], []>} : vector<16x128xbf16>, vector<128x256xbf16>, vector<16x256xf32> -> vector<16x256xf32>
    %28 = vector.broadcast %6 : vector<1x256xf32> to vector<16x256xf32>
    %29 = arith.addf %27, %28 : vector<16x256xf32>
    %cst_23 = arith.constant 0.000000e+00 : f32
    %30 = vector.broadcast %cst_23 : f32 to vector<16x256xf32>
    %31 = arith.maximumf %29, %30 : vector<16x256xf32>
    %c768 = arith.constant 768 : index
    %c0_24 = arith.constant 0 : index
    %32 = vector.load %arg2[%c768, %c0_24] : memref<1408x256xbf16, #tpu.memory_space<vmem>>, vector<256x128xbf16>
    %33 = arith.truncf %19 : vector<16x256xf32> to vector<16x256xbf16>
    %cst_25 = arith.constant dense<0.000000e+00> : vector<16x128xf32>
    %34 = tpu.matmul %33, %32, %cst_25 {dimension_numbers = #tpu.dot_dimension_numbers<[1], [0], [0], [1], [0, 0, 1, 1], [], []>} : vector<16x256xbf16>, vector<256x128xbf16>, vector<16x128xf32> -> vector<16x128xf32>
    %35 = vector.broadcast %8 : vector<1x128xf32> to vector<16x128xf32>
    %36 = arith.addf %34, %35 : vector<16x128xf32>
    %cst_26 = arith.constant 0.000000e+00 : f32
    %37 = vector.broadcast %cst_26 : f32 to vector<16x128xf32>
    %38 = arith.maximumf %36, %37 : vector<16x128xf32>
    %c768_27 = arith.constant 768 : index
    %c128_28 = arith.constant 128 : index
    %39 = vector.load %arg2[%c768_27, %c128_28] : memref<1408x256xbf16, #tpu.memory_space<vmem>>, vector<256x128xbf16>
    %40 = arith.truncf %25 : vector<16x256xf32> to vector<16x256xbf16>
    %cst_29 = arith.constant dense<0.000000e+00> : vector<16x128xf32>
    %41 = tpu.matmul %40, %39, %cst_29 {dimension_numbers = #tpu.dot_dimension_numbers<[1], [0], [0], [1], [0, 0, 1, 1], [], []>} : vector<16x256xbf16>, vector<256x128xbf16>, vector<16x128xf32> -> vector<16x128xf32>
    %42 = vector.broadcast %9 : vector<1x128xf32> to vector<16x128xf32>
    %43 = arith.addf %41, %42 : vector<16x128xf32>
    %cst_30 = arith.constant 0.000000e+00 : f32
    %44 = vector.broadcast %cst_30 : f32 to vector<16x128xf32>
    %45 = arith.maximumf %43, %44 : vector<16x128xf32>
    %c1024 = arith.constant 1024 : index
    %c0_31 = arith.constant 0 : index
    %46 = vector.load %arg2[%c1024, %c0_31] : memref<1408x256xbf16, #tpu.memory_space<vmem>>, vector<256x128xbf16>
    %47 = arith.truncf %31 : vector<16x256xf32> to vector<16x256xbf16>
    %cst_32 = arith.constant dense<0.000000e+00> : vector<16x128xf32>
    %48 = tpu.matmul %47, %46, %cst_32 {dimension_numbers = #tpu.dot_dimension_numbers<[1], [0], [0], [1], [0, 0, 1, 1], [], []>} : vector<16x256xbf16>, vector<256x128xbf16>, vector<16x128xf32> -> vector<16x128xf32>
    %49 = vector.broadcast %10 : vector<1x128xf32> to vector<16x128xf32>
    %50 = arith.addf %48, %49 : vector<16x128xf32>
    %cst_33 = arith.constant 0.000000e+00 : f32
    %51 = vector.broadcast %cst_33 : f32 to vector<16x128xf32>
    %52 = arith.maximumf %50, %51 : vector<16x128xf32>
    %c384 = arith.constant 384 : index
    %c0_34 = arith.constant 0 : index
    %53 = vector.load %arg2[%c384, %c0_34] : memref<1408x256xbf16, #tpu.memory_space<vmem>>, vector<128x256xbf16>
    %54 = arith.truncf %38 : vector<16x128xf32> to vector<16x128xbf16>
    %cst_35 = arith.constant dense<0.000000e+00> : vector<16x256xf32>
    %55 = tpu.matmul %54, %53, %cst_35 {dimension_numbers = #tpu.dot_dimension_numbers<[1], [0], [0], [1], [0, 0, 1, 1], [], []>} : vector<16x128xbf16>, vector<128x256xbf16>, vector<16x256xf32> -> vector<16x256xf32>
    %c512 = arith.constant 512 : index
    %c0_36 = arith.constant 0 : index
    %56 = vector.load %arg2[%c512, %c0_36] : memref<1408x256xbf16, #tpu.memory_space<vmem>>, vector<128x256xbf16>
    %57 = arith.truncf %45 : vector<16x128xf32> to vector<16x128xbf16>
    %cst_37 = arith.constant dense<0.000000e+00> : vector<16x256xf32>
    %58 = tpu.matmul %57, %56, %cst_37 {dimension_numbers = #tpu.dot_dimension_numbers<[1], [0], [0], [1], [0, 0, 1, 1], [], []>} : vector<16x128xbf16>, vector<128x256xbf16>, vector<16x256xf32> -> vector<16x256xf32>
    %59 = arith.addf %55, %58 : vector<16x256xf32>
    %c640 = arith.constant 640 : index
    %c0_38 = arith.constant 0 : index
    %60 = vector.load %arg2[%c640, %c0_38] : memref<1408x256xbf16, #tpu.memory_space<vmem>>, vector<128x256xbf16>
    %61 = arith.truncf %52 : vector<16x128xf32> to vector<16x128xbf16>
    %cst_39 = arith.constant dense<0.000000e+00> : vector<16x256xf32>
    %62 = tpu.matmul %61, %60, %cst_39 {dimension_numbers = #tpu.dot_dimension_numbers<[1], [0], [0], [1], [0, 0, 1, 1], [], []>} : vector<16x128xbf16>, vector<128x256xbf16>, vector<16x256xf32> -> vector<16x256xf32>
    %63 = arith.addf %59, %62 : vector<16x256xf32>
    %64 = vector.broadcast %7 : vector<1x256xf32> to vector<16x256xf32>
    %65 = arith.addf %63, %64 : vector<16x256xf32>
    %cst_40 = arith.constant 0.000000e+00 : f32
    %66 = vector.broadcast %cst_40 : f32 to vector<16x256xf32>
    %67 = arith.maximumf %65, %66 : vector<16x256xf32>
    %c1024_41 = arith.constant 1024 : index
    %c128_42 = arith.constant 128 : index
    %68 = vector.load %arg2[%c1024_41, %c128_42] : memref<1408x256xbf16, #tpu.memory_space<vmem>>, vector<256x128xbf16>
    %69 = arith.truncf %67 : vector<16x256xf32> to vector<16x256xbf16>
    %cst_43 = arith.constant dense<0.000000e+00> : vector<16x128xf32>
    %70 = tpu.matmul %69, %68, %cst_43 {dimension_numbers = #tpu.dot_dimension_numbers<[1], [0], [0], [1], [0, 0, 1, 1], [], []>} : vector<16x256xbf16>, vector<256x128xbf16>, vector<16x128xf32> -> vector<16x128xf32>
    %71 = vector.broadcast %11 : vector<1x128xf32> to vector<16x128xf32>
    %72 = arith.addf %70, %71 : vector<16x128xf32>
    %cst_44 = arith.constant 0.000000e+00 : f32
    %73 = vector.broadcast %cst_44 : f32 to vector<16x128xf32>
    %74 = arith.maximumf %72, %73 : vector<16x128xf32>
    %c1280 = arith.constant 1280 : index
    %c0_45 = arith.constant 0 : index
    %75 = vector.load %arg2[%c1280, %c0_45] : memref<1408x256xbf16, #tpu.memory_space<vmem>>, vector<128x128xbf16>
    %76 = arith.truncf %74 : vector<16x128xf32> to vector<16x128xbf16>
    %cst_46 = arith.constant dense<0.000000e+00> : vector<16x128xf32>
    %77 = tpu.matmul %76, %75, %cst_46 {dimension_numbers = #tpu.dot_dimension_numbers<[1], [0], [0], [1], [0, 0, 1, 1], [], []>} : vector<16x128xbf16>, vector<128x128xbf16>, vector<16x128xf32> -> vector<16x128xf32>
    %78 = vector.broadcast %12 : vector<1x128xf32> to vector<16x128xf32>
    %79 = arith.addf %77, %78 : vector<16x128xf32>
    %80 = vector.extract_strided_slice %79 {offsets = [0, 0], sizes = [16, 1], strides = [1, 1]} : vector<16x128xf32> to vector<16x1xf32>
    %81 = vector.broadcast %80 : vector<16x1xf32> to vector<16x128xf32>
    %82 = arith.mulf %38, %81 : vector<16x128xf32>
    %83 = vector.extract_strided_slice %79 {offsets = [0, 1], sizes = [16, 1], strides = [1, 1]} : vector<16x128xf32> to vector<16x1xf32>
    %84 = vector.broadcast %83 : vector<16x1xf32> to vector<16x128xf32>
    %85 = arith.mulf %45, %84 : vector<16x128xf32>
    %86 = arith.addf %82, %85 : vector<16x128xf32>
    %87 = vector.extract_strided_slice %79 {offsets = [0, 2], sizes = [16, 1], strides = [1, 1]} : vector<16x128xf32> to vector<16x1xf32>
    %88 = vector.broadcast %87 : vector<16x1xf32> to vector<16x128xf32>
    %89 = arith.mulf %52, %88 : vector<16x128xf32>
    %90 = arith.addf %86, %89 : vector<16x128xf32>
    %c0_47 = arith.constant 0 : index
    %c0_48 = arith.constant 0 : index
    %91 = vector.load %arg4[%c0_47, %c0_48] : memref<16x128xf32, #tpu.memory_space<vmem>>, vector<16x128xf32>
    tpu.vector_store %arg4[%c0_47, %c0_48], %90 {strides = array<i32>} : memref<16x128xf32, #tpu.memory_space<vmem>>, vector<16x128xf32>,
    %c1280_49 = arith.constant 1280 : index
    %c128_50 = arith.constant 128 : index
    %92 = vector.load %arg2[%c1280_49, %c128_50] : memref<1408x256xbf16, #tpu.memory_space<vmem>>, vector<128x128xbf16>
    %93 = arith.truncf %90 : vector<16x128xf32> to vector<16x128xbf16>
    %cst_51 = arith.constant dense<0.000000e+00> : vector<16x128xf32>
    %94 = tpu.matmul %93, %92, %cst_51 {dimension_numbers = #tpu.dot_dimension_numbers<[1], [0], [0], [1], [0, 0, 1, 1], [], []>} : vector<16x128xbf16>, vector<128x128xbf16>, vector<16x128xf32> -> vector<16x128xf32>
    %95 = vector.broadcast %13 : vector<1x128xf32> to vector<16x128xf32>
    %96 = arith.addf %94, %95 : vector<16x128xf32>
    %c0_52 = arith.constant 0 : index
    %c0_53 = arith.constant 0 : index
    %97 = vector.load %arg5[%c0_52, %c0_53] : memref<16x128xf32, #tpu.memory_space<vmem>>, vector<16x128xf32>
    tpu.vector_store %arg5[%c0_52, %c0_53], %96 {strides = array<i32>} : memref<16x128xf32, #tpu.memory_space<vmem>>, vector<16x128xf32>,
    return
  }
  func.func @transform_0(%arg0: i32) -> (i32, i32) {
    %c0_i32 = arith.constant 0 : i32
    %c0_i32_0 = arith.constant 0 : i32
    return %arg0, %c0_i32 : i32, i32
  }
  func.func @transform_1(%arg0: i32) -> (i32, i32) {
    %c0_i32 = arith.constant 0 : i32
    %c0_i32_0 = arith.constant 0 : i32
    %c0_i32_1 = arith.constant 0 : i32
    return %c0_i32, %c0_i32_0 : i32, i32
  }
  func.func @transform_2(%arg0: i32) -> (i32, i32) {
    %c0_i32 = arith.constant 0 : i32
    %c0_i32_0 = arith.constant 0 : i32
    %c0_i32_1 = arith.constant 0 : i32
    return %c0_i32, %c0_i32_0 : i32, i32
  }
  func.func @transform_3(%arg0: i32) -> (i32, i32) {
    %c0_i32 = arith.constant 0 : i32
    %c0_i32_0 = arith.constant 0 : i32
    return %arg0, %c0_i32 : i32, i32
  }
  func.func @transform_4(%arg0: i32) -> (i32, i32) {
    %c0_i32 = arith.constant 0 : i32
    %c0_i32_0 = arith.constant 0 : i32
    return %arg0, %c0_i32 : i32, i32
  }
}

</mosaic_0001>

<llo_original>
// kernel: tpu_custom_call.1
$region0: #{tpu_custom_call.1}
  #allocation0 [shape = 'u32[]', space=smem, size = 0x4, offset = 0x4, fixed_abs, tag = 'smem constant byte address 0x4 - core index']
  #allocation1 [shape = 'u32[144,128]{1,0:T(1,128)}', space=vmem, size = 0x12000, scoped, tag = 'internal scratch']
  %s0 = inlined_call_operand.hbm [shape: bf16[16,384], index: 0, kind: input, shape index: {}]
  %s1 = inlined_call_operand.hbm [shape: bf16[1408,256], index: 1, kind: input, shape index: {}]
  %s2 = inlined_call_operand.hbm [shape: f32[8,256], index: 2, kind: input, shape index: {}]
  %s3 = inlined_call_operand.hbm [shape: f32[16,128], index: 3, kind: output, shape index: {0}]
  %s4 = inlined_call_operand.hbm [shape: f32[16,128], index: 4, kind: output, shape index: {1}]
  %5 = xla_tuple %s3, %s4
  %s6 = sld [smem:[#allocation0]]
  $region42: #{tpu_custom_call.1} parent=0
    _
  %s8 = ssub.s32 1, %s6
  %s9 = scalar_select 0, %s8, %s6
  $region1: #{tpu_custom_call.1} parent=0
    #allocation2 [shape = 'u8[12288]{0}', space=vmem, size = 0x3000, scoped, tag = 'input window, operand 0, single buffered']
    #allocation3 [shape = 's32[1]{0}', space=sflag, size = 0x4, scoped, tag = 'scoped memory for tpu_custom_call.1']
    #allocation4 [shape = 's32[1]{0}', space=sflag, size = 0x4, scoped, tag = 'scoped memory for tpu_custom_call.1']
    #allocation5 [shape = 'u8[720896]{0}', space=vmem, size = 0xb0000, scoped, tag = 'input window, operand 1, single buffered']
    #allocation6 [shape = 's32[1]{0}', space=sflag, size = 0x4, scoped, tag = 'scoped memory for tpu_custom_call.1']
    #allocation7 [shape = 'u8[8192]{0}', space=vmem, size = 0x2000, scoped, tag = 'input window, operand 2, single buffered']
    #allocation8 [shape = 'u8[8192]{0}', space=vmem, size = 0x2000, scoped, tag = 'output window, operand 0, single buffered']
    #allocation9 [shape = 'u8[8192]{0}', space=vmem, size = 0x2000, scoped, tag = 'output window, operand 1, single buffered']
    #allocation10 [shape = 's32[1]{0}', space=sflag, size = 0x4, scoped, tag = 'scoped memory for tpu_custom_call.1']
    %10 = vsyncpa [#allocation3], 0
    %11 = vsyncpa [#allocation6], 0
    %12 = vsyncpa [#allocation4], 0
    %13 = vsyncpa [#allocation10], 0
    // Predicated region
    $region2: #{tpu_custom_call.1} parent=1 // pred_check
      _
    $region3: #{tpu_custom_call.1} parent=1 // pred_check_branch
      %15 = sbr.rel (0) target = $region5
    $region4: #{tpu_custom_call.1} parent=1 // pred_region
      %s17 = ssub.s32 384, 384
      %18 = vsyncadd [#allocation3], %s17
      %s19 = sshll.u32 [#allocation2], 4
      %s20 = int_to_ptr.vmem [resolvable:$true] %s19
      %25 = dma.hbm_to_vmem [thread:$0]  %s0, 384, %s20, [#allocation3], 192, 192, 12
    $region5: #{tpu_custom_call.1} parent=1 // pred_fallthru
      _
    // Predicated region
    $region6: #{tpu_custom_call.1} parent=1 // pred_check
      _
    $region7: #{tpu_custom_call.1} parent=1 // pred_check_branch
      %27 = sbr.rel (0) target = $region9
    $region8: #{tpu_custom_call.1} parent=1 // pred_region
      %s29 = ssub.s32 22528, 22528
      %30 = vsyncadd [#allocation6], %s29
      %s31 = sshll.u32 [#allocation5], 4
      %s32 = int_to_ptr.vmem [resolvable:$true] %s31
      %37 = dma.hbm_to_vmem [thread:$0]  %s1, 22528, %s32, [#allocation6], 128, 128, 8
    $region9: #{tpu_custom_call.1} parent=1 // pred_fallthru
      _
    // Predicated region
    $region10: #{tpu_custom_call.1} parent=1 // pred_check
      _
    $region11: #{tpu_custom_call.1} parent=1 // pred_check_branch
      %39 = sbr.rel (0) target = $region13
    $region12: #{tpu_custom_call.1} parent=1 // pred_region
      %s41 = ssub.s32 256, 256
      %42 = vsyncadd [#allocation6], %s41
      %s44 = sshll.u32 [#allocation7], 4
      %s45 = int_to_ptr.vmem [resolvable:$true] %s44
      %47 = dma.hbm_to_vmem [thread:$0]  %s2, 256, %s45, [#allocation6]
    $region13: #{tpu_custom_call.1} parent=1 // pred_fallthru
      _
    // Predicated region
    $region14: #{tpu_custom_call.1} parent=1 // pred_check
      _
    $region15: #{tpu_custom_call.1} parent=1 // pred_check_branch
      %49 = sbr.rel (0) target = $region17
    $region16: #{tpu_custom_call.1} parent=1 // pred_region
      %50 = dma.done [#allocation3], 384
    $region17: #{tpu_custom_call.1} parent=1 // pred_fallthru
      _
    // Predicated region
    $region18: #{tpu_custom_call.1} parent=1 // pred_check
      _
    $region19: #{tpu_custom_call.1} parent=1 // pred_check_branch
      %52 = sbr.rel (0) target = $region21
    $region20: #{tpu_custom_call.1} parent=1 // pred_region
      %53 = dma.done [#allocation6], 22528
    $region21: #{tpu_custom_call.1} parent=1 // pred_fallthru
      _
    // Predicated region
    $region22: #{tpu_custom_call.1} parent=1 // pred_check
      _
    $region23: #{tpu_custom_call.1} parent=1 // pred_check_branch
      %55 = sbr.rel (0) target = $region25
    $region24: #{tpu_custom_call.1} parent=1 // pred_region
      %56 = dma.done [#allocation6], 256
    $region25: #{tpu_custom_call.1} parent=1 // pred_fallthru
      _
    %v58 = vld [vmem:[#allocation2] sm:$0xff]
    %v59 = vld [vmem:[#allocation2 + $0x8] sm:$0xf]
    %v60 = vld [vmem:[#allocation2 + $0xc] sm:$0xff]
    %v61 = vld [vmem:[#allocation2 + $0x14] sm:$0xf]
    %v62 = vld [vmem:[#allocation7] ss:$8 sm:$0x3]
    %s63 = scalar_lea.vmem [#allocation7], 1
    %v64 = vld [vmem:[%s63] ss:$8 sm:$0x3]
    %s65 = scalar_lea.vmem [#allocation7], 2
    %v66 = vld [vmem:[%s65] ss:$8 sm:$0x3]
    %s67 = scalar_lea.vmem [#allocation7], 3
    %v68 = vld [vmem:[%s67] ss:$8 sm:$0x3]
    %v69 = vld [vmem:[#allocation7 + $0x4] ss:$0 sm:$0xff]
    %v70 = vld [vmem:[#allocation7 + $0xc] ss:$0 sm:$0xff]
    %v71 = vld [vmem:[#allocation7 + $0x5] ss:$0 sm:$0xff]
    %v72 = vld [vmem:[#allocation7 + $0xd] ss:$0 sm:$0xff]
    %v73 = vld [vmem:[#allocation7 + $0x6] ss:$0 sm:$0xff]
    %v74 = vld [vmem:[#allocation7 + $0xe] ss:$0 sm:$0xff]
    %v75 = vld [vmem:[#allocation5] sm:$0xff]
    %v76 = vld [vmem:[#allocation5 + $0x8] sm:$0xff]
    %v77 = vld [vmem:[#allocation5 + $0x10] sm:$0xff]
    %v78 = vld [vmem:[#allocation5 + $0x18] sm:$0xff]
    %v79 = vld [vmem:[#allocation5 + $0x20] sm:$0xff]
    %v80 = vld [vmem:[#allocation5 + $0x28] sm:$0xff]
    %v81 = vld [vmem:[#allocation5 + $0x30] sm:$0xff]
    %v82 = vld [vmem:[#allocation5 + $0x38] sm:$0xff]
    %v83 = vld [vmem:[#allocation5 + $0x40] sm:$0xff]
    %v84 = vld [vmem:[#allocation5 + $0x48] sm:$0xff]
    %v85 = vld [vmem:[#allocation5 + $0x50] sm:$0xff]
    %v86 = vld [vmem:[#allocation5 + $0x58] sm:$0xff]
    %v87 = vld [vmem:[#allocation5 + $0x60] sm:$0xff]
    %v88 = vld [vmem:[#allocation5 + $0x68] sm:$0xff]
    %v89 = vld [vmem:[#allocation5 + $0x70] sm:$0xff]
    %v90 = vld [vmem:[#allocation5 + $0x78] sm:$0xff]
    %v92 = vlaneseq
    %v93 = vshrl.u32 %v92, 7
    %v94 = vsub.s32 0, %v93
    %v95 = vrot.slane %v62, %v94
    %v96 = vlaneseq
    %v97 = vshrl.u32 %v96, 7
    %v98 = vsub.s32 1, %v97
    %v99 = vrot.slane %v62, %v98
    %v104 = vunpack.c.l.b16 %v58
    %v105 = vunpack.c.l.b16 %v60
    %v106 = vpack.c.b16 %v105, %v104
    %v124 = vunpack.c.l.b16 %v75
    %v125 = vunpack.c.h.b16 %v75
    %v126 = vunpack.c.l.b16 %v76
    %v127 = vunpack.c.h.b16 %v76
    %v128 = vunpack.c.l.b16 %v77
    %v129 = vunpack.c.h.b16 %v77
    %v130 = vunpack.c.l.b16 %v78
    %v131 = vunpack.c.h.b16 %v78
    %v132 = vunpack.c.l.b16 %v79
    %v133 = vunpack.c.h.b16 %v79
    %v134 = vunpack.c.l.b16 %v80
    %v135 = vunpack.c.h.b16 %v80
    %v136 = vunpack.c.l.b16 %v81
    %v137 = vunpack.c.h.b16 %v81
    %v138 = vunpack.c.l.b16 %v82
    %v139 = vunpack.c.h.b16 %v82
    %v140 = vunpack.c.l.b16 %v83
    %v141 = vunpack.c.h.b16 %v83
    %v142 = vunpack.c.l.b16 %v84
    %v143 = vunpack.c.h.b16 %v84
    %v144 = vunpack.c.l.b16 %v85
    %v145 = vunpack.c.h.b16 %v85
    %v146 = vunpack.c.l.b16 %v86
    %v147 = vunpack.c.h.b16 %v86
    %v148 = vunpack.c.l.b16 %v87
    %v149 = vunpack.c.h.b16 %v87
    %v150 = vunpack.c.l.b16 %v88
    %v151 = vunpack.c.h.b16 %v88
    %v152 = vunpack.c.l.b16 %v89
    %v153 = vunpack.c.h.b16 %v89
    %v154 = vunpack.c.l.b16 %v90
    %v155 = vunpack.c.h.b16 %v90
    %v156 = vpack.c.b16 %v126, %v124
    %v157 = vpack.c.b16 %v127, %v125
    %v158 = vpack.c.b16 %v130, %v128
    %v159 = vpack.c.b16 %v131, %v129
    %v160 = vpack.c.b16 %v134, %v132
    %v161 = vpack.c.b16 %v135, %v133
    %v162 = vpack.c.b16 %v138, %v136
    %v163 = vpack.c.b16 %v139, %v137
    %v164 = vpack.c.b16 %v142, %v140
    %v165 = vpack.c.b16 %v143, %v141
    %v166 = vpack.c.b16 %v146, %v144
    %v167 = vpack.c.b16 %v147, %v145
    %v168 = vpack.c.b16 %v150, %v148
    %v169 = vpack.c.b16 %v151, %v149
    %v170 = vpack.c.b16 %v154, %v152
    %v171 = vpack.c.b16 %v155, %v153
    %188 = vmatprep.subr.bf16.mxu0 %v157
    %189 = vmatpush1.bf16.msra.mxu0 %v156
    %190 = vmatprep.subr.bf16.mxu0 %v159
    %191 = vmatpush1.bf16.msra.mxu0 %v158
    %192 = vmatprep.subr.bf16.mxu0 %v161
    %193 = vmatpush1.bf16.msra.mxu0 %v160
    %194 = vmatprep.subr.bf16.mxu0 %v163
    %195 = vmatpush1.bf16.msra.mxu0 %v162
    %196 = vmatprep.subr.bf16.mxu0 %v165
    %197 = vmatpush1.bf16.msra.mxu0 %v164
    %198 = vmatprep.subr.bf16.mxu0 %v167
    %199 = vmatpush1.bf16.msra.mxu0 %v166
    %200 = vmatprep.subr.bf16.mxu0 %v169
    %201 = vmatpush1.bf16.msra.mxu0 %v168
    %202 = vmatprep.subr.bf16.mxu0 %v171
    %203 = vmatpush1.bf16.msra.mxu0 %v170
    %204 = vmatprep.subr.bf16.mxu0 0
    %205 = vmatpush1.bf16.msra.mxu0 0
    %206 = vmatprep.subr.bf16.mxu0 0
    %207 = vmatpush1.bf16.msra.mxu0 0
    %208 = vmatprep.subr.bf16.mxu0 0
    %209 = vmatpush1.bf16.msra.mxu0 0
    %210 = vmatprep.subr.bf16.mxu0 0
    %211 = vmatpush1.bf16.msra.mxu0 0
    %212 = vmatprep.subr.bf16.mxu0 0
    %213 = vmatpush1.bf16.msra.mxu0 0
    %214 = vmatprep.subr.bf16.mxu0 0
    %215 = vmatpush1.bf16.msra.mxu0 0
    %216 = vmatprep.subr.bf16.mxu0 0
    %217 = vmatpush1.bf16.msra.mxu0 0
    %218 = vmatprep.subr.bf16.mxu0 0
    %219 = vmatpush1.bf16.msra.mxu0 0
    %220 = vmatprep.mubr.bf16.mxu0 0
    %221 = vmatmul.mubr.bf16.gmra.mrb[0].mxu0 %v106
    %v222 = vpop.f32.mrb[0].mxu0
    %v223 = vadd.f32 %v95, %v222
    %v224 = vpop.f32.mrb[0].mxu0
    %v225 = vadd.f32 %v99, %v224
    %v226 = vpop.f32.mrb[0].mxu0
    %v227 = vadd.f32 %v95, %v226
    %v228 = vpop.f32.mrb[0].mxu0
    %v229 = vadd.f32 %v99, %v228
    %230 = vdwg.mxu0
    %v231 = vmax.f32 %v223, 0.0
    %v232 = vmax.f32 %v225, 0.0
    %v233 = vmax.f32 %v227, 0.0
    %v234 = vmax.f32 %v229, 0.0
    %v235 = vld [vmem:[#allocation5 + $0x80] sm:$0xff]
    %v236 = vld [vmem:[#allocation5 + $0x88] sm:$0xff]
    %v237 = vld [vmem:[#allocation5 + $0x90] sm:$0xff]
    %v238 = vld [vmem:[#allocation5 + $0x98] sm:$0xff]
    %v239 = vld [vmem:[#allocation5 + $0xa0] sm:$0xff]
    %v240 = vld [vmem:[#allocation5 + $0xa8] sm:$0xff]
    %v241 = vld [vmem:[#allocation5 + $0xb0] sm:$0xff]
    %v242 = vld [vmem:[#allocation5 + $0xb8] sm:$0xff]
    %v243 = vld [vmem:[#allocation5 + $0xc0] sm:$0xff]
    %v244 = vld [vmem:[#allocation5 + $0xc8] sm:$0xff]
    %v245 = vld [vmem:[#allocation5 + $0xd0] sm:$0xff]
    %v246 = vld [vmem:[#allocation5 + $0xd8] sm:$0xff]
    %v247 = vld [vmem:[#allocation5 + $0xe0] sm:$0xff]
    %v248 = vld [vmem:[#allocation5 + $0xe8] sm:$0xff]
    %v249 = vld [vmem:[#allocation5 + $0xf0] sm:$0xff]
    %v250 = vld [vmem:[#allocation5 + $0xf8] sm:$0xff]
    %v252 = vlaneseq
    %v253 = vshrl.u32 %v252, 7
    %v254 = vsub.s32 0, %v253
    %v255 = vrot.slane %v64, %v254
    %v256 = vlaneseq
    %v257 = vshrl.u32 %v256, 7
    %v258 = vsub.s32 1, %v257
    %v259 = vrot.slane %v64, %v258
    %v262 = vunpack.c.h.b16 %v58
    %v263 = vunpack.c.h.b16 %v60
    %v264 = vpack.c.b16 %v263, %v262
    %v282 = vunpack.c.l.b16 %v235
    %v283 = vunpack.c.h.b16 %v235
    %v284 = vunpack.c.l.b16 %v236
    %v285 = vunpack.c.h.b16 %v236
    %v286 = vunpack.c.l.b16 %v237
    %v287 = vunpack.c.h.b16 %v237
    %v288 = vunpack.c.l.b16 %v238
    %v289 = vunpack.c.h.b16 %v238
    %v290 = vunpack.c.l.b16 %v239
    %v291 = vunpack.c.h.b16 %v239
    %v292 = vunpack.c.l.b16 %v240
    %v293 = vunpack.c.h.b16 %v240
    %v294 = vunpack.c.l.b16 %v241
    %v295 = vunpack.c.h.b16 %v241
    %v296 = vunpack.c.l.b16 %v242
    %v297 = vunpack.c.h.b16 %v242
    %v298 = vunpack.c.l.b16 %v243
    %v299 = vunpack.c.h.b16 %v243
    %v300 = vunpack.c.l.b16 %v244
    %v301 = vunpack.c.h.b16 %v244
    %v302 = vunpack.c.l.b16 %v245
    %v303 = vunpack.c.h.b16 %v245
    %v304 = vunpack.c.l.b16 %v246
    %v305 = vunpack.c.h.b16 %v246
    %v306 = vunpack.c.l.b16 %v247
    %v307 = vunpack.c.h.b16 %v247
    %v308 = vunpack.c.l.b16 %v248
    %v309 = vunpack.c.h.b16 %v248
    %v310 = vunpack.c.l.b16 %v249
    %v311 = vunpack.c.h.b16 %v249
    %v312 = vunpack.c.l.b16 %v250
    %v313 = vunpack.c.h.b16 %v250
    %v314 = vpack.c.b16 %v284, %v282
    %v315 = vpack.c.b16 %v285, %v283
    %v316 = vpack.c.b16 %v288, %v286
    %v317 = vpack.c.b16 %v289, %v287
    %v318 = vpack.c.b16 %v292, %v290
    %v319 = vpack.c.b16 %v293, %v291
    %v320 = vpack.c.b16 %v296, %v294
    %v321 = vpack.c.b16 %v297, %v295
    %v322 = vpack.c.b16 %v300, %v298
    %v323 = vpack.c.b16 %v301, %v299
    %v324 = vpack.c.b16 %v304, %v302
    %v325 = vpack.c.b16 %v305, %v303
    %v326 = vpack.c.b16 %v308, %v306
    %v327 = vpack.c.b16 %v309, %v307
    %v328 = vpack.c.b16 %v312, %v310
    %v329 = vpack.c.b16 %v313, %v311
    %346 = vmatprep.subr.bf16.mxu0 %v315
    %347 = vmatpush1.bf16.msra.mxu0 %v314
    %348 = vmatprep.subr.bf16.mxu0 %v317
    %349 = vmatpush1.bf16.msra.mxu0 %v316
    %350 = vmatprep.subr.bf16.mxu0 %v319
    %351 = vmatpush1.bf16.msra.mxu0 %v318
    %352 = vmatprep.subr.bf16.mxu0 %v321
    %353 = vmatpush1.bf16.msra.mxu0 %v320
    %354 = vmatprep.subr.bf16.mxu0 %v323
    %355 = vmatpush1.bf16.msra.mxu0 %v322
    %356 = vmatprep.subr.bf16.mxu0 %v325
    %357 = vmatpush1.bf16.msra.mxu0 %v324
    %358 = vmatprep.subr.bf16.mxu0 %v327
    %359 = vmatpush1.bf16.msra.mxu0 %v326
    %360 = vmatprep.subr.bf16.mxu0 %v329
    %361 = vmatpush1.bf16.msra.mxu0 %v328
    %362 = vmatprep.subr.bf16.mxu0 0
    %363 = vmatpush1.bf16.msra.mxu0 0
    %364 = vmatprep.subr.bf16.mxu0 0
    %365 = vmatpush1.bf16.msra.mxu0 0
    %366 = vmatprep.subr.bf16.mxu0 0
    %367 = vmatpush1.bf16.msra.mxu0 0
    %368 = vmatprep.subr.bf16.mxu0 0
    %369 = vmatpush1.bf16.msra.mxu0 0
    %370 = vmatprep.subr.bf16.mxu0 0
    %371 = vmatpush1.bf16.msra.mxu0 0
    %372 = vmatprep.subr.bf16.mxu0 0
    %373 = vmatpush1.bf16.msra.mxu0 0
    %374 = vmatprep.subr.bf16.mxu0 0
    %375 = vmatpush1.bf16.msra.mxu0 0
    %376 = vmatprep.subr.bf16.mxu0 0
    %377 = vmatpush1.bf16.msra.mxu0 0
    %378 = vmatprep.mubr.bf16.mxu0 0
    %379 = vmatmul.mubr.bf16.gmra.mrb[0].mxu0 %v264
    %v380 = vpop.f32.mrb[0].mxu0
    %v381 = vadd.f32 %v255, %v380
    %v382 = vpop.f32.mrb[0].mxu0
    %v383 = vadd.f32 %v259, %v382
    %v384 = vpop.f32.mrb[0].mxu0
    %v385 = vadd.f32 %v255, %v384
    %v386 = vpop.f32.mrb[0].mxu0
    %v387 = vadd.f32 %v259, %v386
    %388 = vdwg.mxu0
    %v389 = vmax.f32 %v381, 0.0
    %v390 = vmax.f32 %v383, 0.0
    %v391 = vmax.f32 %v385, 0.0
    %v392 = vmax.f32 %v387, 0.0
    %v393 = vld [vmem:[#allocation5 + $0x100] sm:$0xff]
    %v394 = vld [vmem:[#allocation5 + $0x108] sm:$0xff]
    %v395 = vld [vmem:[#allocation5 + $0x110] sm:$0xff]
    %v396 = vld [vmem:[#allocation5 + $0x118] sm:$0xff]
    %v397 = vld [vmem:[#allocation5 + $0x120] sm:$0xff]
    %v398 = vld [vmem:[#allocation5 + $0x128] sm:$0xff]
    %v399 = vld [vmem:[#allocation5 + $0x130] sm:$0xff]
    %v400 = vld [vmem:[#allocation5 + $0x138] sm:$0xff]
    %v401 = vld [vmem:[#allocation5 + $0x140] sm:$0xff]
    %v402 = vld [vmem:[#allocation5 + $0x148] sm:$0xff]
    %v403 = vld [vmem:[#allocation5 + $0x150] sm:$0xff]
    %v404 = vld [vmem:[#allocation5 + $0x158] sm:$0xff]
    %v405 = vld [vmem:[#allocation5 + $0x160] sm:$0xff]
    %v406 = vld [vmem:[#allocation5 + $0x168] sm:$0xff]
    %v407 = vld [vmem:[#allocation5 + $0x170] sm:$0xff]
    %v408 = vld [vmem:[#allocation5 + $0x178] sm:$0xff]
    %v410 = vlaneseq
    %v411 = vshrl.u32 %v410, 7
    %v412 = vsub.s32 0, %v411
    %v413 = vrot.slane %v66, %v412
    %v414 = vlaneseq
    %v415 = vshrl.u32 %v414, 7
    %v416 = vsub.s32 1, %v415
    %v417 = vrot.slane %v66, %v416
    %v422 = vunpack.c.l.b16 %v59
    %v423 = vunpack.c.l.b16 %v61
    %v424 = vpack.c.b16 %v423, %v422
    %v442 = vunpack.c.l.b16 %v393
    %v443 = vunpack.c.h.b16 %v393
    %v444 = vunpack.c.l.b16 %v394
    %v445 = vunpack.c.h.b16 %v394
    %v446 = vunpack.c.l.b16 %v395
    %v447 = vunpack.c.h.b16 %v395
    %v448 = vunpack.c.l.b16 %v396
    %v449 = vunpack.c.h.b16 %v396
    %v450 = vunpack.c.l.b16 %v397
    %v451 = vunpack.c.h.b16 %v397
    %v452 = vunpack.c.l.b16 %v398
    %v453 = vunpack.c.h.b16 %v398
    %v454 = vunpack.c.l.b16 %v399
    %v455 = vunpack.c.h.b16 %v399
    %v456 = vunpack.c.l.b16 %v400
    %v457 = vunpack.c.h.b16 %v400
    %v458 = vunpack.c.l.b16 %v401
    %v459 = vunpack.c.h.b16 %v401
    %v460 = vunpack.c.l.b16 %v402
    %v461 = vunpack.c.h.b16 %v402
    %v462 = vunpack.c.l.b16 %v403
    %v463 = vunpack.c.h.b16 %v403
    %v464 = vunpack.c.l.b16 %v404
    %v465 = vunpack.c.h.b16 %v404
    %v466 = vunpack.c.l.b16 %v405
    %v467 = vunpack.c.h.b16 %v405
    %v468 = vunpack.c.l.b16 %v406
    %v469 = vunpack.c.h.b16 %v406
    %v470 = vunpack.c.l.b16 %v407
    %v471 = vunpack.c.h.b16 %v407
    %v472 = vunpack.c.l.b16 %v408
    %v473 = vunpack.c.h.b16 %v408
    %v474 = vpack.c.b16 %v444, %v442
    %v475 = vpack.c.b16 %v445, %v443
    %v476 = vpack.c.b16 %v448, %v446
    %v477 = vpack.c.b16 %v449, %v447
    %v478 = vpack.c.b16 %v452, %v450
    %v479 = vpack.c.b16 %v453, %v451
    %v480 = vpack.c.b16 %v456, %v454
    %v481 = vpack.c.b16 %v457, %v455
    %v482 = vpack.c.b16 %v460, %v458
    %v483 = vpack.c.b16 %v461, %v459
    %v484 = vpack.c.b16 %v464, %v462
    %v485 = vpack.c.b16 %v465, %v463
    %v486 = vpack.c.b16 %v468, %v466
    %v487 = vpack.c.b16 %v469, %v467
    %v488 = vpack.c.b16 %v472, %v470
    %v489 = vpack.c.b16 %v473, %v471
    %506 = vmatprep.subr.bf16.mxu0 %v475
    %507 = vmatpush1.bf16.msra.mxu0 %v474
    %508 = vmatprep.subr.bf16.mxu0 %v477
    %509 = vmatpush1.bf16.msra.mxu0 %v476
    %510 = vmatprep.subr.bf16.mxu0 %v479
    %511 = vmatpush1.bf16.msra.mxu0 %v478
    %512 = vmatprep.subr.bf16.mxu0 %v481
    %513 = vmatpush1.bf16.msra.mxu0 %v480
    %514 = vmatprep.subr.bf16.mxu0 %v483
    %515 = vmatpush1.bf16.msra.mxu0 %v482
    %516 = vmatprep.subr.bf16.mxu0 %v485
    %517 = vmatpush1.bf16.msra.mxu0 %v484
    %518 = vmatprep.subr.bf16.mxu0 %v487
    %519 = vmatpush1.bf16.msra.mxu0 %v486
    %520 = vmatprep.subr.bf16.mxu0 %v489
    %521 = vmatpush1.bf16.msra.mxu0 %v488
    %522 = vmatprep.subr.bf16.mxu0 0
    %523 = vmatpush1.bf16.msra.mxu0 0
    %524 = vmatprep.subr.bf16.mxu0 0
    %525 = vmatpush1.bf16.msra.mxu0 0
    %526 = vmatprep.subr.bf16.mxu0 0
    %527 = vmatpush1.bf16.msra.mxu0 0
    %528 = vmatprep.subr.bf16.mxu0 0
    %529 = vmatpush1.bf16.msra.mxu0 0
    %530 = vmatprep.subr.bf16.mxu0 0
    %531 = vmatpush1.bf16.msra.mxu0 0
    %532 = vmatprep.subr.bf16.mxu0 0
    %533 = vmatpush1.bf16.msra.mxu0 0
    %534 = vmatprep.subr.bf16.mxu0 0
    %535 = vmatpush1.bf16.msra.mxu0 0
    %536 = vmatprep.subr.bf16.mxu0 0
    %537 = vmatpush1.bf16.msra.mxu0 0
    %538 = vmatprep.mubr.bf16.mxu0 0
    %539 = vmatmul.mubr.bf16.gmra.mrb[0].mxu0 %v424
    %v540 = vpop.f32.mrb[0].mxu0
    %v541 = vadd.f32 %v413, %v540
    %v542 = vpop.f32.mrb[0].mxu0
    %v543 = vadd.f32 %v417, %v542
    %v544 = vpop.f32.mrb[0].mxu0
    %v545 = vadd.f32 %v413, %v544
    %v546 = vpop.f32.mrb[0].mxu0
    %v547 = vadd.f32 %v417, %v546
    %548 = vdwg.mxu0
    %v549 = vmax.f32 %v541, 0.0
    %v550 = vmax.f32 %v543, 0.0
    %v551 = vmax.f32 %v545, 0.0
    %v552 = vmax.f32 %v547, 0.0
    %v553 = vld [vmem:[#allocation5 + $0x300] sm:$0xf]
    %v554 = vld [vmem:[#allocation5 + $0x308] sm:$0xf]
    %v555 = vld [vmem:[#allocation5 + $0x310] sm:$0xf]
    %v556 = vld [vmem:[#allocation5 + $0x318] sm:$0xf]
    %v557 = vld [vmem:[#allocation5 + $0x320] sm:$0xf]
    %v558 = vld [vmem:[#allocation5 + $0x328] sm:$0xf]
    %v559 = vld [vmem:[#allocation5 + $0x330] sm:$0xf]
    %v560 = vld [vmem:[#allocation5 + $0x338] sm:$0xf]
    %v561 = vld [vmem:[#allocation5 + $0x340] sm:$0xf]
    %v562 = vld [vmem:[#allocation5 + $0x348] sm:$0xf]
    %v563 = vld [vmem:[#allocation5 + $0x350] sm:$0xf]
    %v564 = vld [vmem:[#allocation5 + $0x358] sm:$0xf]
    %v565 = vld [vmem:[#allocation5 + $0x360] sm:$0xf]
    %v566 = vld [vmem:[#allocation5 + $0x368] sm:$0xf]
    %v567 = vld [vmem:[#allocation5 + $0x370] sm:$0xf]
    %v568 = vld [vmem:[#allocation5 + $0x378] sm:$0xf]
    %v569 = vld [vmem:[#allocation5 + $0x380] sm:$0xf]
    %v570 = vld [vmem:[#allocation5 + $0x388] sm:$0xf]
    %v571 = vld [vmem:[#allocation5 + $0x390] sm:$0xf]
    %v572 = vld [vmem:[#allocation5 + $0x398] sm:$0xf]
    %v573 = vld [vmem:[#allocation5 + $0x3a0] sm:$0xf]
    %v574 = vld [vmem:[#allocation5 + $0x3a8] sm:$0xf]
    %v575 = vld [vmem:[#allocation5 + $0x3b0] sm:$0xf]
    %v576 = vld [vmem:[#allocation5 + $0x3b8] sm:$0xf]
    %v577 = vld [vmem:[#allocation5 + $0x3c0] sm:$0xf]
    %v578 = vld [vmem:[#allocation5 + $0x3c8] sm:$0xf]
    %v579 = vld [vmem:[#allocation5 + $0x3d0] sm:$0xf]
    %v580 = vld [vmem:[#allocation5 + $0x3d8] sm:$0xf]
    %v581 = vld [vmem:[#allocation5 + $0x3e0] sm:$0xf]
    %v582 = vld [vmem:[#allocation5 + $0x3e8] sm:$0xf]
    %v583 = vld [vmem:[#allocation5 + $0x3f0] sm:$0xf]
    %v584 = vld [vmem:[#allocation5 + $0x3f8] sm:$0xf]
    %v585 = vpack.c.bf16 %v233, %v231
    %v586 = vpack.c.bf16 %v234, %v232
    %v619 = vunpack.c.l.b16 %v553
    %v620 = vunpack.c.l.b16 %v554
    %v621 = vunpack.c.l.b16 %v555
    %v622 = vunpack.c.l.b16 %v556
    %v623 = vunpack.c.l.b16 %v557
    %v624 = vunpack.c.l.b16 %v558
    %v625 = vunpack.c.l.b16 %v559
    %v626 = vunpack.c.l.b16 %v560
    %v627 = vunpack.c.l.b16 %v561
    %v628 = vunpack.c.l.b16 %v562
    %v629 = vunpack.c.l.b16 %v563
    %v630 = vunpack.c.l.b16 %v564
    %v631 = vunpack.c.l.b16 %v565
    %v632 = vunpack.c.l.b16 %v566
    %v633 = vunpack.c.l.b16 %v567
    %v634 = vunpack.c.l.b16 %v568
    %v635 = vunpack.c.l.b16 %v569
    %v636 = vunpack.c.l.b16 %v570
    %v637 = vunpack.c.l.b16 %v571
    %v638 = vunpack.c.l.b16 %v572
    %v639 = vunpack.c.l.b16 %v573
    %v640 = vunpack.c.l.b16 %v574
    %v641 = vunpack.c.l.b16 %v575
    %v642 = vunpack.c.l.b16 %v576
    %v643 = vunpack.c.l.b16 %v577
    %v644 = vunpack.c.l.b16 %v578
    %v645 = vunpack.c.l.b16 %v579
    %v646 = vunpack.c.l.b16 %v580
    %v647 = vunpack.c.l.b16 %v581
    %v648 = vunpack.c.l.b16 %v582
    %v649 = vunpack.c.l.b16 %v583
    %v650 = vunpack.c.l.b16 %v584
    %v651 = vpack.c.b16 %v620, %v619
    %v652 = vpack.c.b16 %v622, %v621
    %v653 = vpack.c.b16 %v624, %v623
    %v654 = vpack.c.b16 %v626, %v625
    %v655 = vpack.c.b16 %v628, %v627
    %v656 = vpack.c.b16 %v630, %v629
    %v657 = vpack.c.b16 %v632, %v631
    %v658 = vpack.c.b16 %v634, %v633
    %v659 = vpack.c.b16 %v636, %v635
    %v660 = vpack.c.b16 %v638, %v637
    %v661 = vpack.c.b16 %v640, %v639
    %v662 = vpack.c.b16 %v642, %v641
    %v663 = vpack.c.b16 %v644, %v643
    %v664 = vpack.c.b16 %v646, %v645
    %v665 = vpack.c.b16 %v648, %v647
    %v666 = vpack.c.b16 %v650, %v649
    %683 = vmatprep.subr.bf16.mxu0 0
    %684 = vmatpush1.bf16.msra.mxu0 %v651
    %685 = vmatprep.subr.bf16.mxu0 0
    %686 = vmatpush1.bf16.msra.mxu0 %v652
    %687 = vmatprep.subr.bf16.mxu0 0
    %688 = vmatpush1.bf16.msra.mxu0 %v653
    %689 = vmatprep.subr.bf16.mxu0 0
    %690 = vmatpush1.bf16.msra.mxu0 %v654
    %691 = vmatprep.subr.bf16.mxu0 0
    %692 = vmatpush1.bf16.msra.mxu0 %v655
    %693 = vmatprep.subr.bf16.mxu0 0
    %694 = vmatpush1.bf16.msra.mxu0 %v656
    %695 = vmatprep.subr.bf16.mxu0 0
    %696 = vmatpush1.bf16.msra.mxu0 %v657
    %697 = vmatprep.subr.bf16.mxu0 0
    %698 = vmatpush1.bf16.msra.mxu0 %v658
    %699 = vmatprep.subr.bf16.mxu0 0
    %700 = vmatpush1.bf16.msra.mxu0 %v659
    %701 = vmatprep.subr.bf16.mxu0 0
    %702 = vmatpush1.bf16.msra.mxu0 %v660
    %703 = vmatprep.subr.bf16.mxu0 0
    %704 = vmatpush1.bf16.msra.mxu0 %v661
    %705 = vmatprep.subr.bf16.mxu0 0
    %706 = vmatpush1.bf16.msra.mxu0 %v662
    %707 = vmatprep.subr.bf16.mxu0 0
    %708 = vmatpush1.bf16.msra.mxu0 %v663
    %709 = vmatprep.subr.bf16.mxu0 0
    %710 = vmatpush1.bf16.msra.mxu0 %v664
    %711 = vmatprep.subr.bf16.mxu0 0
    %712 = vmatpush1.bf16.msra.mxu0 %v665
    %713 = vmatprep.subr.bf16.mxu0 0
    %714 = vmatpush1.bf16.msra.mxu0 %v666
    %715 = vmatprep.mubr.bf16.mxu0 %v586
    %716 = vmatmul.mubr.bf16.gmra.mrb[0].mxu0 %v585
    %v717 = vpop.f32.mrb[0].mxu0
    %v718 = vadd.f32 %v69, %v717
    %v719 = vpop.f32.mrb[0].mxu0
    %v720 = vpop.f32.mrb[0].mxu0
    %v721 = vadd.f32 %v69, %v720
    %v722 = vpop.f32.mrb[0].mxu0
    %723 = vdwg.mxu0
    %v724 = vmax.f32 %v718, 0.0
    %v725 = vmax.f32 %v721, 0.0
    %v726 = vld [vmem:[#allocation5 + $0x304] sm:$0xf]
    %v727 = vld [vmem:[#allocation5 + $0x30c] sm:$0xf]
    %v728 = vld [vmem:[#allocation5 + $0x314] sm:$0xf]
    %v729 = vld [vmem:[#allocation5 + $0x31c] sm:$0xf]
    %v730 = vld [vmem:[#allocation5 + $0x324] sm:$0xf]
    %v731 = vld [vmem:[#allocation5 + $0x32c] sm:$0xf]
    %v732 = vld [vmem:[#allocation5 + $0x334] sm:$0xf]
    %v733 = vld [vmem:[#allocation5 + $0x33c] sm:$0xf]
    %v734 = vld [vmem:[#allocation5 + $0x344] sm:$0xf]
    %v735 = vld [vmem:[#allocation5 + $0x34c] sm:$0xf]
    %v736 = vld [vmem:[#allocation5 + $0x354] sm:$0xf]
    %v737 = vld [vmem:[#allocation5 + $0x35c] sm:$0xf]
    %v738 = vld [vmem:[#allocation5 + $0x364] sm:$0xf]
    %v739 = vld [vmem:[#allocation5 + $0x36c] sm:$0xf]
    %v740 = vld [vmem:[#allocation5 + $0x374] sm:$0xf]
    %v741 = vld [vmem:[#allocation5 + $0x37c] sm:$0xf]
    %v742 = vld [vmem:[#allocation5 + $0x384] sm:$0xf]
    %v743 = vld [vmem:[#allocation5 + $0x38c] sm:$0xf]
    %v744 = vld [vmem:[#allocation5 + $0x394] sm:$0xf]
    %v745 = vld [vmem:[#allocation5 + $0x39c] sm:$0xf]
    %v746 = vld [vmem:[#allocation5 + $0x3a4] sm:$0xf]
    %v747 = vld [vmem:[#allocation5 + $0x3ac] sm:$0xf]
    %v748 = vld [vmem:[#allocation5 + $0x3b4] sm:$0xf]
    %v749 = vld [vmem:[#allocation5 + $0x3bc] sm:$0xf]
    %v750 = vld [vmem:[#allocation5 + $0x3c4] sm:$0xf]
    %v751 = vld [vmem:[#allocation5 + $0x3cc] sm:$0xf]
    %v752 = vld [vmem:[#allocation5 + $0x3d4] sm:$0xf]
    %v753 = vld [vmem:[#allocation5 + $0x3dc] sm:$0xf]
    %v754 = vld [vmem:[#allocation5 + $0x3e4] sm:$0xf]
    %v755 = vld [vmem:[#allocation5 + $0x3ec] sm:$0xf]
    %v756 = vld [vmem:[#allocation5 + $0x3f4] sm:$0xf]
    %v757 = vld [vmem:[#allocation5 + $0x3fc] sm:$0xf]
    %v758 = vpack.c.bf16 %v391, %v389
    %v759 = vpack.c.bf16 %v392, %v390
    %v792 = vunpack.c.l.b16 %v726
    %v793 = vunpack.c.l.b16 %v727
    %v794 = vunpack.c.l.b16 %v728
    %v795 = vunpack.c.l.b16 %v729
    %v796 = vunpack.c.l.b16 %v730
    %v797 = vunpack.c.l.b16 %v731
    %v798 = vunpack.c.l.b16 %v732
    %v799 = vunpack.c.l.b16 %v733
    %v800 = vunpack.c.l.b16 %v734
    %v801 = vunpack.c.l.b16 %v735
    %v802 = vunpack.c.l.b16 %v736
    %v803 = vunpack.c.l.b16 %v737
    %v804 = vunpack.c.l.b16 %v738
    %v805 = vunpack.c.l.b16 %v739
    %v806 = vunpack.c.l.b16 %v740
    %v807 = vunpack.c.l.b16 %v741
    %v808 = vunpack.c.l.b16 %v742
    %v809 = vunpack.c.l.b16 %v743
    %v810 = vunpack.c.l.b16 %v744
    %v811 = vunpack.c.l.b16 %v745
    %v812 = vunpack.c.l.b16 %v746
    %v813 = vunpack.c.l.b16 %v747
    %v814 = vunpack.c.l.b16 %v748
    %v815 = vunpack.c.l.b16 %v749
    %v816 = vunpack.c.l.b16 %v750
    %v817 = vunpack.c.l.b16 %v751
    %v818 = vunpack.c.l.b16 %v752
    %v819 = vunpack.c.l.b16 %v753
    %v820 = vunpack.c.l.b16 %v754
    %v821 = vunpack.c.l.b16 %v755
    %v822 = vunpack.c.l.b16 %v756
    %v823 = vunpack.c.l.b16 %v757
    %v824 = vpack.c.b16 %v793, %v792
    %v825 = vpack.c.b16 %v795, %v794
    %v826 = vpack.c.b16 %v797, %v796
    %v827 = vpack.c.b16 %v799, %v798
    %v828 = vpack.c.b16 %v801, %v800
    %v829 = vpack.c.b16 %v803, %v802
    %v830 = vpack.c.b16 %v805, %v804
    %v831 = vpack.c.b16 %v807, %v806
    %v832 = vpack.c.b16 %v809, %v808
    %v833 = vpack.c.b16 %v811, %v810
    %v834 = vpack.c.b16 %v813, %v812
    %v835 = vpack.c.b16 %v815, %v814
    %v836 = vpack.c.b16 %v817, %v816
    %v837 = vpack.c.b16 %v819, %v818
    %v838 = vpack.c.b16 %v821, %v820
    %v839 = vpack.c.b16 %v823, %v822
    %856 = vmatprep.subr.bf16.mxu0 0
    %857 = vmatpush1.bf16.msra.mxu0 %v824
    %858 = vmatprep.subr.bf16.mxu0 0
    %859 = vmatpush1.bf16.msra.mxu0 %v825
    %860 = vmatprep.subr.bf16.mxu0 0
    %861 = vmatpush1.bf16.msra.mxu0 %v826
    %862 = vmatprep.subr.bf16.mxu0 0
    %863 = vmatpush1.bf16.msra.mxu0 %v827
    %864 = vmatprep.subr.bf16.mxu0 0
    %865 = vmatpush1.bf16.msra.mxu0 %v828
    %866 = vmatprep.subr.bf16.mxu0 0
    %867 = vmatpush1.bf16.msra.mxu0 %v829
    %868 = vmatprep.subr.bf16.mxu0 0
    %869 = vmatpush1.bf16.msra.mxu0 %v830
    %870 = vmatprep.subr.bf16.mxu0 0
    %871 = vmatpush1.bf16.msra.mxu0 %v831
    %872 = vmatprep.subr.bf16.mxu0 0
    %873 = vmatpush1.bf16.msra.mxu0 %v832
    %874 = vmatprep.subr.bf16.mxu0 0
    %875 = vmatpush1.bf16.msra.mxu0 %v833
    %876 = vmatprep.subr.bf16.mxu0 0
    %877 = vmatpush1.bf16.msra.mxu0 %v834
    %878 = vmatprep.subr.bf16.mxu0 0
    %879 = vmatpush1.bf16.msra.mxu0 %v835
    %880 = vmatprep.subr.bf16.mxu0 0
    %881 = vmatpush1.bf16.msra.mxu0 %v836
    %882 = vmatprep.subr.bf16.mxu0 0
    %883 = vmatpush1.bf16.msra.mxu0 %v837
    %884 = vmatprep.subr.bf16.mxu0 0
    %885 = vmatpush1.bf16.msra.mxu0 %v838
    %886 = vmatprep.subr.bf16.mxu0 0
    %887 = vmatpush1.bf16.msra.mxu0 %v839
    %888 = vmatprep.mubr.bf16.mxu0 %v759
    %889 = vmatmul.mubr.bf16.gmra.mrb[0].mxu0 %v758
    %v890 = vpop.f32.mrb[0].mxu0
    %v891 = vadd.f32 %v70, %v890
    %v892 = vpop.f32.mrb[0].mxu0
    %v893 = vpop.f32.mrb[0].mxu0
    %v894 = vadd.f32 %v70, %v893
    %v895 = vpop.f32.mrb[0].mxu0
    %896 = vdwg.mxu0
    %v897 = vmax.f32 %v891, 0.0
    %v898 = vmax.f32 %v894, 0.0
    %v899 = vld [vmem:[#allocation5 + $0x400] sm:$0xf]
    %v900 = vld [vmem:[#allocation5 + $0x408] sm:$0xf]
    %v901 = vld [vmem:[#allocation5 + $0x410] sm:$0xf]
    %v902 = vld [vmem:[#allocation5 + $0x418] sm:$0xf]
    %v903 = vld [vmem:[#allocation5 + $0x420] sm:$0xf]
    %v904 = vld [vmem:[#allocation5 + $0x428] sm:$0xf]
    %v905 = vld [vmem:[#allocation5 + $0x430] sm:$0xf]
    %v906 = vld [vmem:[#allocation5 + $0x438] sm:$0xf]
    %v907 = vld [vmem:[#allocation5 + $0x440] sm:$0xf]
    %v908 = vld [vmem:[#allocation5 + $0x448] sm:$0xf]
    %v909 = vld [vmem:[#allocation5 + $0x450] sm:$0xf]
    %v910 = vld [vmem:[#allocation5 + $0x458] sm:$0xf]
    %v911 = vld [vmem:[#allocation5 + $0x460] sm:$0xf]
    %v912 = vld [vmem:[#allocation5 + $0x468] sm:$0xf]
    %v913 = vld [vmem:[#allocation5 + $0x470] sm:$0xf]
    %v914 = vld [vmem:[#allocation5 + $0x478] sm:$0xf]
    %v915 = vld [vmem:[#allocation5 + $0x480] sm:$0xf]
    %v916 = vld [vmem:[#allocation5 + $0x488] sm:$0xf]
    %v917 = vld [vmem:[#allocation5 + $0x490] sm:$0xf]
    %v918 = vld [vmem:[#allocation5 + $0x498] sm:$0xf]
    %v919 = vld [vmem:[#allocation5 + $0x4a0] sm:$0xf]
    %v920 = vld [vmem:[#allocation5 + $0x4a8] sm:$0xf]
    %v921 = vld [vmem:[#allocation5 + $0x4b0] sm:$0xf]
    %v922 = vld [vmem:[#allocation5 + $0x4b8] sm:$0xf]
    %v923 = vld [vmem:[#allocation5 + $0x4c0] sm:$0xf]
    %v924 = vld [vmem:[#allocation5 + $0x4c8] sm:$0xf]
    %v925 = vld [vmem:[#allocation5 + $0x4d0] sm:$0xf]
    %v926 = vld [vmem:[#allocation5 + $0x4d8] sm:$0xf]
    %v927 = vld [vmem:[#allocation5 + $0x4e0] sm:$0xf]
    %v928 = vld [vmem:[#allocation5 + $0x4e8] sm:$0xf]
    %v929 = vld [vmem:[#allocation5 + $0x4f0] sm:$0xf]
    %v930 = vld [vmem:[#allocation5 + $0x4f8] sm:$0xf]
    %v931 = vpack.c.bf16 %v551, %v549
    %v932 = vpack.c.bf16 %v552, %v550
    %v965 = vunpack.c.l.b16 %v899
    %v966 = vunpack.c.l.b16 %v900
    %v967 = vunpack.c.l.b16 %v901
    %v968 = vunpack.c.l.b16 %v902
    %v969 = vunpack.c.l.b16 %v903
    %v970 = vunpack.c.l.b16 %v904
    %v971 = vunpack.c.l.b16 %v905
    %v972 = vunpack.c.l.b16 %v906
    %v973 = vunpack.c.l.b16 %v907
    %v974 = vunpack.c.l.b16 %v908
    %v975 = vunpack.c.l.b16 %v909
    %v976 = vunpack.c.l.b16 %v910
    %v977 = vunpack.c.l.b16 %v911
    %v978 = vunpack.c.l.b16 %v912
    %v979 = vunpack.c.l.b16 %v913
    %v980 = vunpack.c.l.b16 %v914
    %v981 = vunpack.c.l.b16 %v915
    %v982 = vunpack.c.l.b16 %v916
    %v983 = vunpack.c.l.b16 %v917
    %v984 = vunpack.c.l.b16 %v918
    %v985 = vunpack.c.l.b16 %v919
    %v986 = vunpack.c.l.b16 %v920
    %v987 = vunpack.c.l.b16 %v921
    %v988 = vunpack.c.l.b16 %v922
    %v989 = vunpack.c.l.b16 %v923
    %v990 = vunpack.c.l.b16 %v924
    %v991 = vunpack.c.l.b16 %v925
    %v992 = vunpack.c.l.b16 %v926
    %v993 = vunpack.c.l.b16 %v927
    %v994 = vunpack.c.l.b16 %v928
    %v995 = vunpack.c.l.b16 %v929
    %v996 = vunpack.c.l.b16 %v930
    %v997 = vpack.c.b16 %v966, %v965
    %v998 = vpack.c.b16 %v968, %v967
    %v999 = vpack.c.b16 %v970, %v969
    %v1000 = vpack.c.b16 %v972, %v971
    %v1001 = vpack.c.b16 %v974, %v973
    %v1002 = vpack.c.b16 %v976, %v975
    %v1003 = vpack.c.b16 %v978, %v977
    %v1004 = vpack.c.b16 %v980, %v979
    %v1005 = vpack.c.b16 %v982, %v981
    %v1006 = vpack.c.b16 %v984, %v983
    %v1007 = vpack.c.b16 %v986, %v985
    %v1008 = vpack.c.b16 %v988, %v987
    %v1009 = vpack.c.b16 %v990, %v989
    %v1010 = vpack.c.b16 %v992, %v991
    %v1011 = vpack.c.b16 %v994, %v993
    %v1012 = vpack.c.b16 %v996, %v995
    %1029 = vmatprep.subr.bf16.mxu0 0
    %1030 = vmatpush1.bf16.msra.mxu0 %v997
    %1031 = vmatprep.subr.bf16.mxu0 0
    %1032 = vmatpush1.bf16.msra.mxu0 %v998
    %1033 = vmatprep.subr.bf16.mxu0 0
    %1034 = vmatpush1.bf16.msra.mxu0 %v999
    %1035 = vmatprep.subr.bf16.mxu0 0
    %1036 = vmatpush1.bf16.msra.mxu0 %v1000
    %1037 = vmatprep.subr.bf16.mxu0 0
    %1038 = vmatpush1.bf16.msra.mxu0 %v1001
    %1039 = vmatprep.subr.bf16.mxu0 0
    %1040 = vmatpush1.bf16.msra.mxu0 %v1002
    %1041 = vmatprep.subr.bf16.mxu0 0
    %1042 = vmatpush1.bf16.msra.mxu0 %v1003
    %1043 = vmatprep.subr.bf16.mxu0 0
    %1044 = vmatpush1.bf16.msra.mxu0 %v1004
    %1045 = vmatprep.subr.bf16.mxu0 0
    %1046 = vmatpush1.bf16.msra.mxu0 %v1005
    %1047 = vmatprep.subr.bf16.mxu0 0
    %1048 = vmatpush1.bf16.msra.mxu0 %v1006
    %1049 = vmatprep.subr.bf16.mxu0 0
    %1050 = vmatpush1.bf16.msra.mxu0 %v1007
    %1051 = vmatprep.subr.bf16.mxu0 0
    %1052 = vmatpush1.bf16.msra.mxu0 %v1008
    %1053 = vmatprep.subr.bf16.mxu0 0
    %1054 = vmatpush1.bf16.msra.mxu0 %v1009
    %1055 = vmatprep.subr.bf16.mxu0 0
    %1056 = vmatpush1.bf16.msra.mxu0 %v1010
    %1057 = vmatprep.subr.bf16.mxu0 0
    %1058 = vmatpush1.bf16.msra.mxu0 %v1011
    %1059 = vmatprep.subr.bf16.mxu0 0
    %1060 = vmatpush1.bf16.msra.mxu0 %v1012
    %1061 = vmatprep.mubr.bf16.mxu0 %v932
    %1062 = vmatmul.mubr.bf16.gmra.mrb[0].mxu0 %v931
    %v1063 = vpop.f32.mrb[0].mxu0
    %v1064 = vadd.f32 %v71, %v1063
    %v1065 = vpop.f32.mrb[0].mxu0
    %v1066 = vpop.f32.mrb[0].mxu0
    %v1067 = vadd.f32 %v71, %v1066
    %v1068 = vpop.f32.mrb[0].mxu0
    %1069 = vdwg.mxu0
    %v1070 = vmax.f32 %v1064, 0.0
    %v1071 = vmax.f32 %v1067, 0.0
    %v1072 = vld [vmem:[#allocation5 + $0x180] sm:$0xff]
    %v1073 = vld [vmem:[#allocation5 + $0x188] sm:$0xff]
    %v1074 = vld [vmem:[#allocation5 + $0x190] sm:$0xff]
    %v1075 = vld [vmem:[#allocation5 + $0x198] sm:$0xff]
    %v1076 = vld [vmem:[#allocation5 + $0x1a0] sm:$0xff]
    %v1077 = vld [vmem:[#allocation5 + $0x1a8] sm:$0xff]
    %v1078 = vld [vmem:[#allocation5 + $0x1b0] sm:$0xff]
    %v1079 = vld [vmem:[#allocation5 + $0x1b8] sm:$0xff]
    %v1080 = vld [vmem:[#allocation5 + $0x1c0] sm:$0xff]
    %v1081 = vld [vmem:[#allocation5 + $0x1c8] sm:$0xff]
    %v1082 = vld [vmem:[#allocation5 + $0x1d0] sm:$0xff]
    %v1083 = vld [vmem:[#allocation5 + $0x1d8] sm:$0xff]
    %v1084 = vld [vmem:[#allocation5 + $0x1e0] sm:$0xff]
    %v1085 = vld [vmem:[#allocation5 + $0x1e8] sm:$0xff]
    %v1086 = vld [vmem:[#allocation5 + $0x1f0] sm:$0xff]
    %v1087 = vld [vmem:[#allocation5 + $0x1f8] sm:$0xff]
    %v1088 = vpack.c.bf16 %v725, %v724
    %v1089 = vld [vmem:[#allocation5 + $0x200] sm:$0xff]
    %v1090 = vld [vmem:[#allocation5 + $0x208] sm:$0xff]
    %v1091 = vld [vmem:[#allocation5 + $0x210] sm:$0xff]
    %v1092 = vld [vmem:[#allocation5 + $0x218] sm:$0xff]
    %v1093 = vld [vmem:[#allocation5 + $0x220] sm:$0xff]
    %v1094 = vld [vmem:[#allocation5 + $0x228] sm:$0xff]
    %v1095 = vld [vmem:[#allocation5 + $0x230] sm:$0xff]
    %v1096 = vld [vmem:[#allocation5 + $0x238] sm:$0xff]
    %v1097 = vld [vmem:[#allocation5 + $0x240] sm:$0xff]
    %v1098 = vld [vmem:[#allocation5 + $0x248] sm:$0xff]
    %v1099 = vld [vmem:[#allocation5 + $0x250] sm:$0xff]
    %v1100 = vld [vmem:[#allocation5 + $0x258] sm:$0xff]
    %v1101 = vld [vmem:[#allocation5 + $0x260] sm:$0xff]
    %v1102 = vld [vmem:[#allocation5 + $0x268] sm:$0xff]
    %v1103 = vld [vmem:[#allocation5 + $0x270] sm:$0xff]
    %v1104 = vld [vmem:[#allocation5 + $0x278] sm:$0xff]
    %v1105 = vpack.c.bf16 %v898, %v897
    %v1122 = vunpack.c.l.b16 %v1089
    %v1123 = vunpack.c.h.b16 %v1089
    %v1124 = vunpack.c.l.b16 %v1090
    %v1125 = vunpack.c.h.b16 %v1090
    %v1126 = vunpack.c.l.b16 %v1091
    %v1127 = vunpack.c.h.b16 %v1091
    %v1128 = vunpack.c.l.b16 %v1092
    %v1129 = vunpack.c.h.b16 %v1092
    %v1130 = vunpack.c.l.b16 %v1093
    %v1131 = vunpack.c.h.b16 %v1093
    %v1132 = vunpack.c.l.b16 %v1094
    %v1133 = vunpack.c.h.b16 %v1094
    %v1134 = vunpack.c.l.b16 %v1095
    %v1135 = vunpack.c.h.b16 %v1095
    %v1136 = vunpack.c.l.b16 %v1096
    %v1137 = vunpack.c.h.b16 %v1096
    %v1138 = vunpack.c.l.b16 %v1097
    %v1139 = vunpack.c.h.b16 %v1097
    %v1140 = vunpack.c.l.b16 %v1098
    %v1141 = vunpack.c.h.b16 %v1098
    %v1142 = vunpack.c.l.b16 %v1099
    %v1143 = vunpack.c.h.b16 %v1099
    %v1144 = vunpack.c.l.b16 %v1100
    %v1145 = vunpack.c.h.b16 %v1100
    %v1146 = vunpack.c.l.b16 %v1101
    %v1147 = vunpack.c.h.b16 %v1101
    %v1148 = vunpack.c.l.b16 %v1102
    %v1149 = vunpack.c.h.b16 %v1102
    %v1150 = vunpack.c.l.b16 %v1103
    %v1151 = vunpack.c.h.b16 %v1103
    %v1152 = vunpack.c.l.b16 %v1104
    %v1153 = vunpack.c.h.b16 %v1104
    %v1154 = vpack.c.b16 %v1124, %v1122
    %v1155 = vpack.c.b16 %v1125, %v1123
    %v1156 = vpack.c.b16 %v1128, %v1126
    %v1157 = vpack.c.b16 %v1129, %v1127
    %v1158 = vpack.c.b16 %v1132, %v1130
    %v1159 = vpack.c.b16 %v1133, %v1131
    %v1160 = vpack.c.b16 %v1136, %v1134
    %v1161 = vpack.c.b16 %v1137, %v1135
    %v1162 = vpack.c.b16 %v1140, %v1138
    %v1163 = vpack.c.b16 %v1141, %v1139
    %v1164 = vpack.c.b16 %v1144, %v1142
    %v1165 = vpack.c.b16 %v1145, %v1143
    %v1166 = vpack.c.b16 %v1148, %v1146
    %v1167 = vpack.c.b16 %v1149, %v1147
    %v1168 = vpack.c.b16 %v1152, %v1150
    %v1169 = vpack.c.b16 %v1153, %v1151
    %1186 = vmatprep.subr.bf16.mxu0 %v1155
    %1187 = vmatpush1.bf16.msra.mxu0 %v1154
    %1188 = vmatprep.subr.bf16.mxu0 %v1157
    %1189 = vmatpush1.bf16.msra.mxu0 %v1156
    %1190 = vmatprep.subr.bf16.mxu0 %v1159
    %1191 = vmatpush1.bf16.msra.mxu0 %v1158
    %1192 = vmatprep.subr.bf16.mxu0 %v1161
    %1193 = vmatpush1.bf16.msra.mxu0 %v1160
    %1194 = vmatprep.subr.bf16.mxu0 %v1163
    %1195 = vmatpush1.bf16.msra.mxu0 %v1162
    %1196 = vmatprep.subr.bf16.mxu0 %v1165
    %1197 = vmatpush1.bf16.msra.mxu0 %v1164
    %1198 = vmatprep.subr.bf16.mxu0 %v1167
    %1199 = vmatpush1.bf16.msra.mxu0 %v1166
    %1200 = vmatprep.subr.bf16.mxu0 %v1169
    %1201 = vmatpush1.bf16.msra.mxu0 %v1168
    %1202 = vmatprep.subr.bf16.mxu0 0
    %1203 = vmatpush1.bf16.msra.mxu0 0
    %1204 = vmatprep.subr.bf16.mxu0 0
    %1205 = vmatpush1.bf16.msra.mxu0 0
    %1206 = vmatprep.subr.bf16.mxu0 0
    %1207 = vmatpush1.bf16.msra.mxu0 0
    %1208 = vmatprep.subr.bf16.mxu0 0
    %1209 = vmatpush1.bf16.msra.mxu0 0
    %1210 = vmatprep.subr.bf16.mxu0 0
    %1211 = vmatpush1.bf16.msra.mxu0 0
    %1212 = vmatprep.subr.bf16.mxu0 0
    %1213 = vmatpush1.bf16.msra.mxu0 0
    %1214 = vmatprep.subr.bf16.mxu0 0
    %1215 = vmatpush1.bf16.msra.mxu0 0
    %1216 = vmatprep.subr.bf16.mxu0 0
    %1217 = vmatpush1.bf16.msra.mxu0 0
    %1218 = vmatprep.mubr.bf16.mxu0 0
    %1219 = vmatmul.mubr.bf16.gmra.mrb[0].mxu0 %v1105
    %v1220 = vpop.f32.mrb[0].mxu0
    %v1221 = vadd.f32 0.0, %v1220
    %v1222 = vpop.f32.mrb[0].mxu0
    %v1223 = vadd.f32 0.0, %v1222
    %v1224 = vpop.f32.mrb[0].mxu0
    %v1225 = vadd.f32 0.0, %v1224
    %v1226 = vpop.f32.mrb[0].mxu0
    %v1227 = vadd.f32 0.0, %v1226
    %1228 = vdwg.mxu0
    %v1245 = vunpack.c.l.b16 %v1072
    %v1246 = vunpack.c.h.b16 %v1072
    %v1247 = vunpack.c.l.b16 %v1073
    %v1248 = vunpack.c.h.b16 %v1073
    %v1249 = vunpack.c.l.b16 %v1074
    %v1250 = vunpack.c.h.b16 %v1074
    %v1251 = vunpack.c.l.b16 %v1075
    %v1252 = vunpack.c.h.b16 %v1075
    %v1253 = vunpack.c.l.b16 %v1076
    %v1254 = vunpack.c.h.b16 %v1076
    %v1255 = vunpack.c.l.b16 %v1077
    %v1256 = vunpack.c.h.b16 %v1077
    %v1257 = vunpack.c.l.b16 %v1078
    %v1258 = vunpack.c.h.b16 %v1078
    %v1259 = vunpack.c.l.b16 %v1079
    %v1260 = vunpack.c.h.b16 %v1079
    %v1261 = vunpack.c.l.b16 %v1080
    %v1262 = vunpack.c.h.b16 %v1080
    %v1263 = vunpack.c.l.b16 %v1081
    %v1264 = vunpack.c.h.b16 %v1081
    %v1265 = vunpack.c.l.b16 %v1082
    %v1266 = vunpack.c.h.b16 %v1082
    %v1267 = vunpack.c.l.b16 %v1083
    %v1268 = vunpack.c.h.b16 %v1083
    %v1269 = vunpack.c.l.b16 %v1084
    %v1270 = vunpack.c.h.b16 %v1084
    %v1271 = vunpack.c.l.b16 %v1085
    %v1272 = vunpack.c.h.b16 %v1085
    %v1273 = vunpack.c.l.b16 %v1086
    %v1274 = vunpack.c.h.b16 %v1086
    %v1275 = vunpack.c.l.b16 %v1087
    %v1276 = vunpack.c.h.b16 %v1087
    %v1277 = vpack.c.b16 %v1247, %v1245
    %v1278 = vpack.c.b16 %v1248, %v1246
    %v1279 = vpack.c.b16 %v1251, %v1249
    %v1280 = vpack.c.b16 %v1252, %v1250
    %v1281 = vpack.c.b16 %v1255, %v1253
    %v1282 = vpack.c.b16 %v1256, %v1254
    %v1283 = vpack.c.b16 %v1259, %v1257
    %v1284 = vpack.c.b16 %v1260, %v1258
    %v1285 = vpack.c.b16 %v1263, %v1261
    %v1286 = vpack.c.b16 %v1264, %v1262
    %v1287 = vpack.c.b16 %v1267, %v1265
    %v1288 = vpack.c.b16 %v1268, %v1266
    %v1289 = vpack.c.b16 %v1271, %v1269
    %v1290 = vpack.c.b16 %v1272, %v1270
    %v1291 = vpack.c.b16 %v1275, %v1273
    %v1292 = vpack.c.b16 %v1276, %v1274
    %1309 = vmatprep.subr.bf16.mxu0 %v1278
    %1310 = vmatpush1.bf16.msra.mxu0 %v1277
    %1311 = vmatprep.subr.bf16.mxu0 %v1280
    %1312 = vmatpush1.bf16.msra.mxu0 %v1279
    %1313 = vmatprep.subr.bf16.mxu0 %v1282
    %1314 = vmatpush1.bf16.msra.mxu0 %v1281
    %1315 = vmatprep.subr.bf16.mxu0 %v1284
    %1316 = vmatpush1.bf16.msra.mxu0 %v1283
    %1317 = vmatprep.subr.bf16.mxu0 %v1286
    %1318 = vmatpush1.bf16.msra.mxu0 %v1285
    %1319 = vmatprep.subr.bf16.mxu0 %v1288
    %1320 = vmatpush1.bf16.msra.mxu0 %v1287
    %1321 = vmatprep.subr.bf16.mxu0 %v1290
    %1322 = vmatpush1.bf16.msra.mxu0 %v1289
    %1323 = vmatprep.subr.bf16.mxu0 %v1292
    %1324 = vmatpush1.bf16.msra.mxu0 %v1291
    %1325 = vmatprep.subr.bf16.mxu0 0
    %1326 = vmatpush1.bf16.msra.mxu0 0
    %1327 = vmatprep.subr.bf16.mxu0 0
    %1328 = vmatpush1.bf16.msra.mxu0 0
    %1329 = vmatprep.subr.bf16.mxu0 0
    %1330 = vmatpush1.bf16.msra.mxu0 0
    %1331 = vmatprep.subr.bf16.mxu0 0
    %1332 = vmatpush1.bf16.msra.mxu0 0
    %1333 = vmatprep.subr.bf16.mxu0 0
    %1334 = vmatpush1.bf16.msra.mxu0 0
    %1335 = vmatprep.subr.bf16.mxu0 0
    %1336 = vmatpush1.bf16.msra.mxu0 0
    %1337 = vmatprep.subr.bf16.mxu0 0
    %1338 = vmatpush1.bf16.msra.mxu0 0
    %1339 = vmatprep.subr.bf16.mxu0 0
    %1340 = vmatpush1.bf16.msra.mxu0 0
    %1341 = vmatprep.mubr.bf16.mxu0 0
    %1342 = vmatmul.mubr.bf16.gmra.mrb[0].mxu0 %v1088
    %v1343 = vpop.f32.mrb[0].mxu0
    %v1344 = vadd.f32 %v1221, %v1343
    %v1345 = vpop.f32.mrb[0].mxu0
    %v1346 = vadd.f32 %v1223, %v1345
    %v1347 = vpop.f32.mrb[0].mxu0
    %v1348 = vadd.f32 %v1225, %v1347
    %v1349 = vpop.f32.mrb[0].mxu0
    %v1350 = vadd.f32 %v1227, %v1349
    %1351 = vdwg.mxu0
    %v1352 = vld [vmem:[#allocation5 + $0x280] sm:$0xff]
    %v1353 = vld [vmem:[#allocation5 + $0x288] sm:$0xff]
    %v1354 = vld [vmem:[#allocation5 + $0x290] sm:$0xff]
    %v1355 = vld [vmem:[#allocation5 + $0x298] sm:$0xff]
    %v1356 = vld [vmem:[#allocation5 + $0x2a0] sm:$0xff]
    %v1357 = vld [vmem:[#allocation5 + $0x2a8] sm:$0xff]
    %v1358 = vld [vmem:[#allocation5 + $0x2b0] sm:$0xff]
    %v1359 = vld [vmem:[#allocation5 + $0x2b8] sm:$0xff]
    %v1360 = vld [vmem:[#allocation5 + $0x2c0] sm:$0xff]
    %v1361 = vld [vmem:[#allocation5 + $0x2c8] sm:$0xff]
    %v1362 = vld [vmem:[#allocation5 + $0x2d0] sm:$0xff]
    %v1363 = vld [vmem:[#allocation5 + $0x2d8] sm:$0xff]
    %v1364 = vld [vmem:[#allocation5 + $0x2e0] sm:$0xff]
    %v1365 = vld [vmem:[#allocation5 + $0x2e8] sm:$0xff]
    %v1366 = vld [vmem:[#allocation5 + $0x2f0] sm:$0xff]
    %v1367 = vld [vmem:[#allocation5 + $0x2f8] sm:$0xff]
    %v1368 = vpack.c.bf16 %v1071, %v1070
    %v1385 = vunpack.c.l.b16 %v1352
    %v1386 = vunpack.c.h.b16 %v1352
    %v1387 = vunpack.c.l.b16 %v1353
    %v1388 = vunpack.c.h.b16 %v1353
    %v1389 = vunpack.c.l.b16 %v1354
    %v1390 = vunpack.c.h.b16 %v1354
    %v1391 = vunpack.c.l.b16 %v1355
    %v1392 = vunpack.c.h.b16 %v1355
    %v1393 = vunpack.c.l.b16 %v1356
    %v1394 = vunpack.c.h.b16 %v1356
    %v1395 = vunpack.c.l.b16 %v1357
    %v1396 = vunpack.c.h.b16 %v1357
    %v1397 = vunpack.c.l.b16 %v1358
    %v1398 = vunpack.c.h.b16 %v1358
    %v1399 = vunpack.c.l.b16 %v1359
    %v1400 = vunpack.c.h.b16 %v1359
    %v1401 = vunpack.c.l.b16 %v1360
    %v1402 = vunpack.c.h.b16 %v1360
    %v1403 = vunpack.c.l.b16 %v1361
    %v1404 = vunpack.c.h.b16 %v1361
    %v1405 = vunpack.c.l.b16 %v1362
    %v1406 = vunpack.c.h.b16 %v1362
    %v1407 = vunpack.c.l.b16 %v1363
    %v1408 = vunpack.c.h.b16 %v1363
    %v1409 = vunpack.c.l.b16 %v1364
    %v1410 = vunpack.c.h.b16 %v1364
    %v1411 = vunpack.c.l.b16 %v1365
    %v1412 = vunpack.c.h.b16 %v1365
    %v1413 = vunpack.c.l.b16 %v1366
    %v1414 = vunpack.c.h.b16 %v1366
    %v1415 = vunpack.c.l.b16 %v1367
    %v1416 = vunpack.c.h.b16 %v1367
    %v1417 = vpack.c.b16 %v1387, %v1385
    %v1418 = vpack.c.b16 %v1388, %v1386
    %v1419 = vpack.c.b16 %v1391, %v1389
    %v1420 = vpack.c.b16 %v1392, %v1390
    %v1421 = vpack.c.b16 %v1395, %v1393
    %v1422 = vpack.c.b16 %v1396, %v1394
    %v1423 = vpack.c.b16 %v1399, %v1397
    %v1424 = vpack.c.b16 %v1400, %v1398
    %v1425 = vpack.c.b16 %v1403, %v1401
    %v1426 = vpack.c.b16 %v1404, %v1402
    %v1427 = vpack.c.b16 %v1407, %v1405
    %v1428 = vpack.c.b16 %v1408, %v1406
    %v1429 = vpack.c.b16 %v1411, %v1409
    %v1430 = vpack.c.b16 %v1412, %v1410
    %v1431 = vpack.c.b16 %v1415, %v1413
    %v1432 = vpack.c.b16 %v1416, %v1414
    %1449 = vmatprep.subr.bf16.mxu0 %v1418
    %1450 = vmatpush1.bf16.msra.mxu0 %v1417
    %1451 = vmatprep.subr.bf16.mxu0 %v1420
    %1452 = vmatpush1.bf16.msra.mxu0 %v1419
    %1453 = vmatprep.subr.bf16.mxu0 %v1422
    %1454 = vmatpush1.bf16.msra.mxu0 %v1421
    %1455 = vmatprep.subr.bf16.mxu0 %v1424
    %1456 = vmatpush1.bf16.msra.mxu0 %v1423
    %1457 = vmatprep.subr.bf16.mxu0 %v1426
    %1458 = vmatpush1.bf16.msra.mxu0 %v1425
    %1459 = vmatprep.subr.bf16.mxu0 %v1428
    %1460 = vmatpush1.bf16.msra.mxu0 %v1427
    %1461 = vmatprep.subr.bf16.mxu0 %v1430
    %1462 = vmatpush1.bf16.msra.mxu0 %v1429
    %1463 = vmatprep.subr.bf16.mxu0 %v1432
    %1464 = vmatpush1.bf16.msra.mxu0 %v1431
    %1465 = vmatprep.subr.bf16.mxu0 0
    %1466 = vmatpush1.bf16.msra.mxu0 0
    %1467 = vmatprep.subr.bf16.mxu0 0
    %1468 = vmatpush1.bf16.msra.mxu0 0
    %1469 = vmatprep.subr.bf16.mxu0 0
    %1470 = vmatpush1.bf16.msra.mxu0 0
    %1471 = vmatprep.subr.bf16.mxu0 0
    %1472 = vmatpush1.bf16.msra.mxu0 0
    %1473 = vmatprep.subr.bf16.mxu0 0
    %1474 = vmatpush1.bf16.msra.mxu0 0
    %1475 = vmatprep.subr.bf16.mxu0 0
    %1476 = vmatpush1.bf16.msra.mxu0 0
    %1477 = vmatprep.subr.bf16.mxu0 0
    %1478 = vmatpush1.bf16.msra.mxu0 0
    %1479 = vmatprep.subr.bf16.mxu0 0
    %1480 = vmatpush1.bf16.msra.mxu0 0
    %1481 = vmatprep.mubr.bf16.mxu0 0
    %1482 = vmatmul.mubr.bf16.gmra.mrb[0].mxu0 %v1368
    %v1483 = vpop.f32.mrb[0].mxu0
    %v1484 = vadd.f32 0.0, %v1483
    %v1485 = vpop.f32.mrb[0].mxu0
    %v1486 = vadd.f32 0.0, %v1485
    %v1487 = vpop.f32.mrb[0].mxu0
    %v1488 = vadd.f32 0.0, %v1487
    %v1489 = vpop.f32.mrb[0].mxu0
    %v1490 = vadd.f32 0.0, %v1489
    %1491 = vdwg.mxu0
    %v1492 = vadd.f32 %v1344, %v1484
    %v1493 = vadd.f32 %v1346, %v1486
    %v1494 = vadd.f32 %v1348, %v1488
    %v1495 = vadd.f32 %v1350, %v1490
    %v1497 = vlaneseq
    %v1498 = vshrl.u32 %v1497, 7
    %v1499 = vsub.s32 0, %v1498
    %v1500 = vrot.slane %v68, %v1499
    %v1501 = vlaneseq
    %v1502 = vshrl.u32 %v1501, 7
    %v1503 = vsub.s32 1, %v1502
    %v1504 = vrot.slane %v68, %v1503
    %v1507 = vadd.f32 %v1492, %v1500
    %v1508 = vadd.f32 %v1493, %v1504
    %v1509 = vadd.f32 %v1494, %v1500
    %v1510 = vadd.f32 %v1495, %v1504
    %v1511 = vmax.f32 %v1507, 0.0
    %v1512 = vmax.f32 %v1508, 0.0
    %v1513 = vmax.f32 %v1509, 0.0
    %v1514 = vmax.f32 %v1510, 0.0
    %v1515 = vld [vmem:[#allocation5 + $0x404] sm:$0xf]
    %v1516 = vld [vmem:[#allocation5 + $0x40c] sm:$0xf]
    %v1517 = vld [vmem:[#allocation5 + $0x414] sm:$0xf]
    %v1518 = vld [vmem:[#allocation5 + $0x41c] sm:$0xf]
    %v1519 = vld [vmem:[#allocation5 + $0x424] sm:$0xf]
    %v1520 = vld [vmem:[#allocation5 + $0x42c] sm:$0xf]
    %v1521 = vld [vmem:[#allocation5 + $0x434] sm:$0xf]
    %v1522 = vld [vmem:[#allocation5 + $0x43c] sm:$0xf]
    %v1523 = vld [vmem:[#allocation5 + $0x444] sm:$0xf]
    %v1524 = vld [vmem:[#allocation5 + $0x44c] sm:$0xf]
    %v1525 = vld [vmem:[#allocation5 + $0x454] sm:$0xf]
    %v1526 = vld [vmem:[#allocation5 + $0x45c] sm:$0xf]
    %v1527 = vld [vmem:[#allocation5 + $0x464] sm:$0xf]
    %v1528 = vld [vmem:[#allocation5 + $0x46c] sm:$0xf]
    %v1529 = vld [vmem:[#allocation5 + $0x474] sm:$0xf]
    %v1530 = vld [vmem:[#allocation5 + $0x47c] sm:$0xf]
    %v1531 = vld [vmem:[#allocation5 + $0x484] sm:$0xf]
    %v1532 = vld [vmem:[#allocation5 + $0x48c] sm:$0xf]
    %v1533 = vld [vmem:[#allocation5 + $0x494] sm:$0xf]
    %v1534 = vld [vmem:[#allocation5 + $0x49c] sm:$0xf]
    %v1535 = vld [vmem:[#allocation5 + $0x4a4] sm:$0xf]
    %v1536 = vld [vmem:[#allocation5 + $0x4ac] sm:$0xf]
    %v1537 = vld [vmem:[#allocation5 + $0x4b4] sm:$0xf]
    %v1538 = vld [vmem:[#allocation5 + $0x4bc] sm:$0xf]
    %v1539 = vld [vmem:[#allocation5 + $0x4c4] sm:$0xf]
    %v1540 = vld [vmem:[#allocation5 + $0x4cc] sm:$0xf]
    %v1541 = vld [vmem:[#allocation5 + $0x4d4] sm:$0xf]
    %v1542 = vld [vmem:[#allocation5 + $0x4dc] sm:$0xf]
    %v1543 = vld [vmem:[#allocation5 + $0x4e4] sm:$0xf]
    %v1544 = vld [vmem:[#allocation5 + $0x4ec] sm:$0xf]
    %v1545 = vld [vmem:[#allocation5 + $0x4f4] sm:$0xf]
    %v1546 = vld [vmem:[#allocation5 + $0x4fc] sm:$0xf]
    %v1547 = vpack.c.bf16 %v1513, %v1511
    %v1548 = vpack.c.bf16 %v1514, %v1512
    %v1581 = vunpack.c.l.b16 %v1515
    %v1582 = vunpack.c.l.b16 %v1516
    %v1583 = vunpack.c.l.b16 %v1517
    %v1584 = vunpack.c.l.b16 %v1518
    %v1585 = vunpack.c.l.b16 %v1519
    %v1586 = vunpack.c.l.b16 %v1520
    %v1587 = vunpack.c.l.b16 %v1521
    %v1588 = vunpack.c.l.b16 %v1522
    %v1589 = vunpack.c.l.b16 %v1523
    %v1590 = vunpack.c.l.b16 %v1524
    %v1591 = vunpack.c.l.b16 %v1525
    %v1592 = vunpack.c.l.b16 %v1526
    %v1593 = vunpack.c.l.b16 %v1527
    %v1594 = vunpack.c.l.b16 %v1528
    %v1595 = vunpack.c.l.b16 %v1529
    %v1596 = vunpack.c.l.b16 %v1530
    %v1597 = vunpack.c.l.b16 %v1531
    %v1598 = vunpack.c.l.b16 %v1532
    %v1599 = vunpack.c.l.b16 %v1533
    %v1600 = vunpack.c.l.b16 %v1534
    %v1601 = vunpack.c.l.b16 %v1535
    %v1602 = vunpack.c.l.b16 %v1536
    %v1603 = vunpack.c.l.b16 %v1537
    %v1604 = vunpack.c.l.b16 %v1538
    %v1605 = vunpack.c.l.b16 %v1539
    %v1606 = vunpack.c.l.b16 %v1540
    %v1607 = vunpack.c.l.b16 %v1541
    %v1608 = vunpack.c.l.b16 %v1542
    %v1609 = vunpack.c.l.b16 %v1543
    %v1610 = vunpack.c.l.b16 %v1544
    %v1611 = vunpack.c.l.b16 %v1545
    %v1612 = vunpack.c.l.b16 %v1546
    %v1613 = vpack.c.b16 %v1582, %v1581
    %v1614 = vpack.c.b16 %v1584, %v1583
    %v1615 = vpack.c.b16 %v1586, %v1585
    %v1616 = vpack.c.b16 %v1588, %v1587
    %v1617 = vpack.c.b16 %v1590, %v1589
    %v1618 = vpack.c.b16 %v1592, %v1591
    %v1619 = vpack.c.b16 %v1594, %v1593
    %v1620 = vpack.c.b16 %v1596, %v1595
    %v1621 = vpack.c.b16 %v1598, %v1597
    %v1622 = vpack.c.b16 %v1600, %v1599
    %v1623 = vpack.c.b16 %v1602, %v1601
    %v1624 = vpack.c.b16 %v1604, %v1603
    %v1625 = vpack.c.b16 %v1606, %v1605
    %v1626 = vpack.c.b16 %v1608, %v1607
    %v1627 = vpack.c.b16 %v1610, %v1609
    %v1628 = vpack.c.b16 %v1612, %v1611
    %1645 = vmatprep.subr.bf16.mxu0 0
    %1646 = vmatpush1.bf16.msra.mxu0 %v1613
    %1647 = vmatprep.subr.bf16.mxu0 0
    %1648 = vmatpush1.bf16.msra.mxu0 %v1614
    %1649 = vmatprep.subr.bf16.mxu0 0
    %1650 = vmatpush1.bf16.msra.mxu0 %v1615
    %1651 = vmatprep.subr.bf16.mxu0 0
    %1652 = vmatpush1.bf16.msra.mxu0 %v1616
    %1653 = vmatprep.subr.bf16.mxu0 0
    %1654 = vmatpush1.bf16.msra.mxu0 %v1617
    %1655 = vmatprep.subr.bf16.mxu0 0
    %1656 = vmatpush1.bf16.msra.mxu0 %v1618
    %1657 = vmatprep.subr.bf16.mxu0 0
    %1658 = vmatpush1.bf16.msra.mxu0 %v1619
    %1659 = vmatprep.subr.bf16.mxu0 0
    %1660 = vmatpush1.bf16.msra.mxu0 %v1620
    %1661 = vmatprep.subr.bf16.mxu0 0
    %1662 = vmatpush1.bf16.msra.mxu0 %v1621
    %1663 = vmatprep.subr.bf16.mxu0 0
    %1664 = vmatpush1.bf16.msra.mxu0 %v1622
    %1665 = vmatprep.subr.bf16.mxu0 0
    %1666 = vmatpush1.bf16.msra.mxu0 %v1623
    %1667 = vmatprep.subr.bf16.mxu0 0
    %1668 = vmatpush1.bf16.msra.mxu0 %v1624
    %1669 = vmatprep.subr.bf16.mxu0 0
    %1670 = vmatpush1.bf16.msra.mxu0 %v1625
    %1671 = vmatprep.subr.bf16.mxu0 0
    %1672 = vmatpush1.bf16.msra.mxu0 %v1626
    %1673 = vmatprep.subr.bf16.mxu0 0
    %1674 = vmatpush1.bf16.msra.mxu0 %v1627
    %1675 = vmatprep.subr.bf16.mxu0 0
    %1676 = vmatpush1.bf16.msra.mxu0 %v1628
    %1677 = vmatprep.mubr.bf16.mxu0 %v1548
    %1678 = vmatmul.mubr.bf16.gmra.mrb[0].mxu0 %v1547
    %v1679 = vpop.f32.mrb[0].mxu0
    %v1680 = vadd.f32 %v72, %v1679
    %v1681 = vpop.f32.mrb[0].mxu0
    %v1682 = vpop.f32.mrb[0].mxu0
    %v1683 = vadd.f32 %v72, %v1682
    %v1684 = vpop.f32.mrb[0].mxu0
    %1685 = vdwg.mxu0
    %v1686 = vmax.f32 %v1680, 0.0
    %v1687 = vmax.f32 %v1683, 0.0
    %v1688 = vld [vmem:[#allocation5 + $0x500] sm:$0xf]
    %v1689 = vld [vmem:[#allocation5 + $0x508] sm:$0xf]
    %v1690 = vld [vmem:[#allocation5 + $0x510] sm:$0xf]
    %v1691 = vld [vmem:[#allocation5 + $0x518] sm:$0xf]
    %v1692 = vld [vmem:[#allocation5 + $0x520] sm:$0xf]
    %v1693 = vld [vmem:[#allocation5 + $0x528] sm:$0xf]
    %v1694 = vld [vmem:[#allocation5 + $0x530] sm:$0xf]
    %v1695 = vld [vmem:[#allocation5 + $0x538] sm:$0xf]
    %v1696 = vld [vmem:[#allocation5 + $0x540] sm:$0xf]
    %v1697 = vld [vmem:[#allocation5 + $0x548] sm:$0xf]
    %v1698 = vld [vmem:[#allocation5 + $0x550] sm:$0xf]
    %v1699 = vld [vmem:[#allocation5 + $0x558] sm:$0xf]
    %v1700 = vld [vmem:[#allocation5 + $0x560] sm:$0xf]
    %v1701 = vld [vmem:[#allocation5 + $0x568] sm:$0xf]
    %v1702 = vld [vmem:[#allocation5 + $0x570] sm:$0xf]
    %v1703 = vld [vmem:[#allocation5 + $0x578] sm:$0xf]
    %v1704 = vpack.c.bf16 %v1687, %v1686
    %v1721 = vunpack.c.l.b16 %v1688
    %v1722 = vunpack.c.l.b16 %v1689
    %v1723 = vunpack.c.l.b16 %v1690
    %v1724 = vunpack.c.l.b16 %v1691
    %v1725 = vunpack.c.l.b16 %v1692
    %v1726 = vunpack.c.l.b16 %v1693
    %v1727 = vunpack.c.l.b16 %v1694
    %v1728 = vunpack.c.l.b16 %v1695
    %v1729 = vunpack.c.l.b16 %v1696
    %v1730 = vunpack.c.l.b16 %v1697
    %v1731 = vunpack.c.l.b16 %v1698
    %v1732 = vunpack.c.l.b16 %v1699
    %v1733 = vunpack.c.l.b16 %v1700
    %v1734 = vunpack.c.l.b16 %v1701
    %v1735 = vunpack.c.l.b16 %v1702
    %v1736 = vunpack.c.l.b16 %v1703
    %v1737 = vpack.c.b16 %v1722, %v1721
    %v1738 = vpack.c.b16 %v1724, %v1723
    %v1739 = vpack.c.b16 %v1726, %v1725
    %v1740 = vpack.c.b16 %v1728, %v1727
    %v1741 = vpack.c.b16 %v1730, %v1729
    %v1742 = vpack.c.b16 %v1732, %v1731
    %v1743 = vpack.c.b16 %v1734, %v1733
    %v1744 = vpack.c.b16 %v1736, %v1735
    %1753 = vmatprep.subr.bf16.mxu0 0
    %1754 = vmatpush1.bf16.msra.mxu0 %v1737
    %1755 = vmatprep.subr.bf16.mxu0 0
    %1756 = vmatpush1.bf16.msra.mxu0 %v1738
    %1757 = vmatprep.subr.bf16.mxu0 0
    %1758 = vmatpush1.bf16.msra.mxu0 %v1739
    %1759 = vmatprep.subr.bf16.mxu0 0
    %1760 = vmatpush1.bf16.msra.mxu0 %v1740
    %1761 = vmatprep.subr.bf16.mxu0 0
    %1762 = vmatpush1.bf16.msra.mxu0 %v1741
    %1763 = vmatprep.subr.bf16.mxu0 0
    %1764 = vmatpush1.bf16.msra.mxu0 %v1742
    %1765 = vmatprep.subr.bf16.mxu0 0
    %1766 = vmatpush1.bf16.msra.mxu0 %v1743
    %1767 = vmatprep.subr.bf16.mxu0 0
    %1768 = vmatpush1.bf16.msra.mxu0 %v1744
    %1769 = vmatprep.subr.bf16.mxu0 0
    %1770 = vmatpush1.bf16.msra.mxu0 0
    %1771 = vmatprep.subr.bf16.mxu0 0
    %1772 = vmatpush1.bf16.msra.mxu0 0
    %1773 = vmatprep.subr.bf16.mxu0 0
    %1774 = vmatpush1.bf16.msra.mxu0 0
    %1775 = vmatprep.subr.bf16.mxu0 0
    %1776 = vmatpush1.bf16.msra.mxu0 0
    %1777 = vmatprep.subr.bf16.mxu0 0
    %1778 = vmatpush1.bf16.msra.mxu0 0
    %1779 = vmatprep.subr.bf16.mxu0 0
    %1780 = vmatpush1.bf16.msra.mxu0 0
    %1781 = vmatprep.subr.bf16.mxu0 0
    %1782 = vmatpush1.bf16.msra.mxu0 0
    %1783 = vmatprep.subr.bf16.mxu0 0
    %1784 = vmatpush1.bf16.msra.mxu0 0
    %1785 = vmatprep.mubr.bf16.mxu0 0
    %1786 = vmatmul.mubr.bf16.gmra.mrb[0].mxu0 %v1704
    %v1787 = vpop.f32.mrb[0].mxu0
    %v1788 = vadd.f32 %v73, %v1787
    %v1789 = vpop.f32.mrb[0].mxu0
    %v1790 = vpop.f32.mrb[0].mxu0
    %v1791 = vadd.f32 %v73, %v1790
    %v1792 = vpop.f32.mrb[0].mxu0
    %1793 = vdwg.mxu0
    %1795 = vset.pattern.permute.xlu0 0
    %1796 = vperm.xlu0 %1795, %v1788
    %v1797 = vpop.permute.xlu0 %1796
    %1800 = vset.pattern.permute.xlu0 0
    %1801 = vperm.xlu0 %1800, %v1791
    %v1802 = vpop.permute.xlu0 %1801
    %v1804 = vmul.f32 %v724, %v1797
    %v1805 = vmul.f32 %v725, %v1802
    %1806 = vset.pattern.permute.xlu0 1
    %1807 = vperm.xlu0 %1806, %v1788
    %v1808 = vpop.permute.xlu0 %1807
    %1810 = vset.pattern.permute.xlu0 1
    %1811 = vperm.xlu0 %1810, %v1791
    %v1812 = vpop.permute.xlu0 %1811
    %v1814 = vmul.f32 %v897, %v1808
    %v1815 = vmul.f32 %v898, %v1812
    %v1816 = vadd.f32 %v1804, %v1814
    %v1817 = vadd.f32 %v1805, %v1815
    %1818 = vset.pattern.permute.xlu0 2
    %1819 = vperm.xlu0 %1818, %v1788
    %v1820 = vpop.permute.xlu0 %1819
    %1822 = vset.pattern.permute.xlu0 2
    %1823 = vperm.xlu0 %1822, %v1791
    %v1824 = vpop.permute.xlu0 %1823
    %v1826 = vmul.f32 %v1070, %v1820
    %v1827 = vmul.f32 %v1071, %v1824
    %v1828 = vadd.f32 %v1816, %v1826
    %v1829 = vadd.f32 %v1817, %v1827
    %1830 = vst [vmem:[#allocation8] sm:$0xff] %v1828
    %1831 = vst [vmem:[#allocation8 + $0x8] sm:$0xff] %v1829
    %v1832 = vld [vmem:[#allocation5 + $0x504] sm:$0xf]
    %v1833 = vld [vmem:[#allocation5 + $0x50c] sm:$0xf]
    %v1834 = vld [vmem:[#allocation5 + $0x514] sm:$0xf]
    %v1835 = vld [vmem:[#allocation5 + $0x51c] sm:$0xf]
    %v1836 = vld [vmem:[#allocation5 + $0x524] sm:$0xf]
    %v1837 = vld [vmem:[#allocation5 + $0x52c] sm:$0xf]
    %v1838 = vld [vmem:[#allocation5 + $0x534] sm:$0xf]
    %v1839 = vld [vmem:[#allocation5 + $0x53c] sm:$0xf]
    %v1840 = vld [vmem:[#allocation5 + $0x544] sm:$0xf]
    %v1841 = vld [vmem:[#allocation5 + $0x54c] sm:$0xf]
    %v1842 = vld [vmem:[#allocation5 + $0x554] sm:$0xf]
    %v1843 = vld [vmem:[#allocation5 + $0x55c] sm:$0xf]
    %v1844 = vld [vmem:[#allocation5 + $0x564] sm:$0xf]
    %v1845 = vld [vmem:[#allocation5 + $0x56c] sm:$0xf]
    %v1846 = vld [vmem:[#allocation5 + $0x574] sm:$0xf]
    %v1847 = vld [vmem:[#allocation5 + $0x57c] sm:$0xf]
    %v1848 = vpack.c.bf16 %v1829, %v1828
    %v1865 = vunpack.c.l.b16 %v1832
    %v1866 = vunpack.c.l.b16 %v1833
    %v1867 = vunpack.c.l.b16 %v1834
    %v1868 = vunpack.c.l.b16 %v1835
    %v1869 = vunpack.c.l.b16 %v1836
    %v1870 = vunpack.c.l.b16 %v1837
    %v1871 = vunpack.c.l.b16 %v1838
    %v1872 = vunpack.c.l.b16 %v1839
    %v1873 = vunpack.c.l.b16 %v1840
    %v1874 = vunpack.c.l.b16 %v1841
    %v1875 = vunpack.c.l.b16 %v1842
    %v1876 = vunpack.c.l.b16 %v1843
    %v1877 = vunpack.c.l.b16 %v1844
    %v1878 = vunpack.c.l.b16 %v1845
    %v1879 = vunpack.c.l.b16 %v1846
    %v1880 = vunpack.c.l.b16 %v1847
    %v1881 = vpack.c.b16 %v1866, %v1865
    %v1882 = vpack.c.b16 %v1868, %v1867
    %v1883 = vpack.c.b16 %v1870, %v1869
    %v1884 = vpack.c.b16 %v1872, %v1871
    %v1885 = vpack.c.b16 %v1874, %v1873
    %v1886 = vpack.c.b16 %v1876, %v1875
    %v1887 = vpack.c.b16 %v1878, %v1877
    %v1888 = vpack.c.b16 %v1880, %v1879
    %1897 = vmatprep.subr.bf16.mxu0 0
    %1898 = vmatpush1.bf16.msra.mxu0 %v1881
    %1899 = vmatprep.subr.bf16.mxu0 0
    %1900 = vmatpush1.bf16.msra.mxu0 %v1882
    %1901 = vmatprep.subr.bf16.mxu0 0
    %1902 = vmatpush1.bf16.msra.mxu0 %v1883
    %1903 = vmatprep.subr.bf16.mxu0 0
    %1904 = vmatpush1.bf16.msra.mxu0 %v1884
    %1905 = vmatprep.subr.bf16.mxu0 0
    %1906 = vmatpush1.bf16.msra.mxu0 %v1885
    %1907 = vmatprep.subr.bf16.mxu0 0
    %1908 = vmatpush1.bf16.msra.mxu0 %v1886
    %1909 = vmatprep.subr.bf16.mxu0 0
    %1910 = vmatpush1.bf16.msra.mxu0 %v1887
    %1911 = vmatprep.subr.bf16.mxu0 0
    %1912 = vmatpush1.bf16.msra.mxu0 %v1888
    %1913 = vmatprep.subr.bf16.mxu0 0
    %1914 = vmatpush1.bf16.msra.mxu0 0
    %1915 = vmatprep.subr.bf16.mxu0 0
    %1916 = vmatpush1.bf16.msra.mxu0 0
    %1917 = vmatprep.subr.bf16.mxu0 0
    %1918 = vmatpush1.bf16.msra.mxu0 0
    %1919 = vmatprep.subr.bf16.mxu0 0
    %1920 = vmatpush1.bf16.msra.mxu0 0
    %1921 = vmatprep.subr.bf16.mxu0 0
    %1922 = vmatpush1.bf16.msra.mxu0 0
    %1923 = vmatprep.subr.bf16.mxu0 0
    %1924 = vmatpush1.bf16.msra.mxu0 0
    %1925 = vmatprep.subr.bf16.mxu0 0
    %1926 = vmatpush1.bf16.msra.mxu0 0
    %1927 = vmatprep.subr.bf16.mxu0 0
    %1928 = vmatpush1.bf16.msra.mxu0 0
    %1929 = vmatprep.mubr.bf16.mxu0 0
    %1930 = vmatmul.mubr.bf16.gmra.mrb[0].mxu0 %v1848
    %v1931 = vpop.f32.mrb[0].mxu0
    %v1932 = vadd.f32 %v74, %v1931
    %v1933 = vpop.f32.mrb[0].mxu0
    %v1934 = vpop.f32.mrb[0].mxu0
    %v1935 = vadd.f32 %v74, %v1934
    %v1936 = vpop.f32.mrb[0].mxu0
    %1937 = vdwg.mxu0
    %1938 = vst [vmem:[#allocation9] sm:$0xff] %v1932
    %1939 = vst [vmem:[#allocation9 + $0x8] sm:$0xff] %v1935
    // Predicated region
    $region26: #{tpu_custom_call.1} parent=1 // pred_check
      _
    $region27: #{tpu_custom_call.1} parent=1 // pred_check_branch
      %1941 = sbr.rel (0) target = $region29
    $region28: #{tpu_custom_call.1} parent=1 // pred_region
      %s1943 = ssub.s32 256, 256
      %1944 = vsyncadd [#allocation4], %s1943
      %s1945 = sshll.u32 [#allocation8], 4
      %s1946 = int_to_ptr.vmem [resolvable:$true] %s1945
      %1951 = dma.vmem_to_hbm [thread:$0]  %s1946, 256, %s3, [#allocation4], 128, 128, 8
    $region29: #{tpu_custom_call.1} parent=1 // pred_fallthru
      _
    // Predicated region
    $region30: #{tpu_custom_call.1} parent=1 // pred_check
      _
    $region31: #{tpu_custom_call.1} parent=1 // pred_check_branch
      %1953 = sbr.rel (0) target = $region33
    $region32: #{tpu_custom_call.1} parent=1 // pred_region
      %s1955 = ssub.s32 256, 256
      %1956 = vsyncadd [#allocation10], %s1955
      %s1957 = sshll.u32 [#allocation9], 4
      %s1958 = int_to_ptr.vmem [resolvable:$true] %s1957
      %1963 = dma.vmem_to_hbm [thread:$0]  %s1958, 256, %s4, [#allocation10], 128, 128, 8
    $region33: #{tpu_custom_call.1} parent=1 // pred_fallthru
      _
    // Predicated region
    $region34: #{tpu_custom_call.1} parent=1 // pred_check
      _
    $region35: #{tpu_custom_call.1} parent=1 // pred_check_branch
      %1965 = sbr.rel (0) target = $region37
    $region36: #{tpu_custom_call.1} parent=1 // pred_region
      %1966 = dma.done [#allocation4], 256
    $region37: #{tpu_custom_call.1} parent=1 // pred_fallthru
      _
    // Predicated region
    $region38: #{tpu_custom_call.1} parent=1 // pred_check
      _
    $region39: #{tpu_custom_call.1} parent=1 // pred_check_branch
      %1968 = sbr.rel (0) target = $region41
    $region40: #{tpu_custom_call.1} parent=1 // pred_region
      %1969 = dma.done [#allocation10], 256
    $region41: #{tpu_custom_call.1} parent=1 // pred_fallthru
      _
    %1970 = vsyncpa [#allocation3], 1
    %1971 = vsyncpa [#allocation6], 1
    %1972 = vsyncpa [#allocation4], 1
    %1973 = vsyncpa [#allocation10], 1

</llo_original>
